<compile_context>
chip_gen: v5e
topology: v5e:2x2
jax: 0.10.0
libtpu: 0.0.40
codegen_flags: <defaults>
</compile_context>

<pallas_src>
import jax
import jax.numpy as jnp
from jax.experimental import pallas as pl
from jax.experimental.pallas import tpu as pltpu


def mlp_kernel(x_ref, w1_ref, b1_ref, w2_ref, b2_ref, o_ref):
    # Hot path: two bf16 MXU matmuls (f32 accumulation) + VPU cast/bias/ReLU,
    # fully fused in VMEM.  Weights/biases are resident (same block every step).
    x = x_ref[...].astype(jnp.bfloat16)                   # in-kernel cast (VPU)
    h = jnp.dot(x, w1_ref[...],
                preferred_element_type=jnp.float32)       # (TB, 512) f32
    h = jnp.maximum(h + b1_ref[...], 0.0)                 # bias + ReLU (f32)
    h = h.astype(jnp.bfloat16)                            # bf16 for 2nd MXU pass
    y = jnp.dot(h, w2_ref[...],
                preferred_element_type=jnp.float32)       # (TB, 256) f32
    o_ref[...] = (y + b2_ref[...]).astype(o_ref.dtype)


def _round_up(n, m):
    return ((n + m - 1) // m) * m


def _tensorcores_per_chip():
    """Best-effort TC count; falls back to 1 (v5e/v6e behavior)."""
    try:
        info = pltpu.get_tpu_info()
        for attr in ("num_cores", "tensorcores_per_chip", "num_tensorcores",
                     "core_count"):
            n = getattr(info, attr, None)
            if isinstance(n, int) and n > 0:
                return n
    except Exception:
        pass
    return 1


def prepare_params(w1, b1, w2, b2):
    """One-time param conversion (hoisted out of the per-call wrapper)."""
    return (w1.astype(jnp.bfloat16),
            jnp.asarray(b1, jnp.float32).reshape(1, -1),
            w2.astype(jnp.bfloat16),
            jnp.asarray(b2, jnp.float32).reshape(1, -1))


def custom_llm_model(x, w1, b1, w2, b2, *, tile_b=1024, out_dtype=None):
    """x: (B, 768) -> (B, 256).

    Weights stored as (in, out); biases 1-D or (1, out).  MXU operands are
    bf16 with f32 accumulation (loses a little precision vs. the f32 PyTorch
    module; tolerance ~3e-2).  out_dtype defaults to x.dtype.
    """
    B, D_in = x.shape
    D_hid = w1.shape[1]
    D_out = w2.shape[1]
    assert D_in == 768 and D_hid == 512 and D_out == 256
    out_dtype = x.dtype if out_dtype is None else out_dtype

    # --- balanced batch tiling: cdiv grid + masked partial last tile ---
    ncores = _tensorcores_per_chip()
    steps = max(pl.cdiv(B, tile_b), 1)
    if ncores > 1 and B >= 128 * ncores:
        # v7x-style multi-TC chips: even number of steps so both TCs get work.
        steps = _round_up(steps, ncores)
    tb = _round_up(pl.cdiv(B, steps), 8)          # sublane-aligned rows
    grid = (pl.cdiv(B, tb),)                      # last tile masked by Pallas

    # No-ops if params came from prepare_params().
    w1_bf16 = w1.astype(jnp.bfloat16)
    w2_bf16 = w2.astype(jnp.bfloat16)
    b1_2d = jnp.asarray(b1, jnp.float32).reshape(1, D_hid)
    b2_2d = jnp.asarray(b2, jnp.float32).reshape(1, D_out)

    out = pl.pallas_call(
        mlp_kernel,
        out_shape=jax.ShapeDtypeStruct((B, D_out), out_dtype),
        grid_spec=pltpu.PrefetchScalarGridSpec(
            num_scalar_prefetch=0,
            grid=grid,
            in_specs=[
                pl.BlockSpec((tb, D_in), lambda i: (i, 0)),       # x tile (streamed, native dtype)
                pl.BlockSpec((D_in, D_hid), lambda i: (0, 0)),    # w1 (resident)
                pl.BlockSpec((1, D_hid), lambda i: (0, 0)),       # b1
                pl.BlockSpec((D_hid, D_out), lambda i: (0, 0)),   # w2 (resident)
                pl.BlockSpec((1, D_out), lambda i: (0, 0)),       # b2
            ],
            out_specs=pl.BlockSpec((tb, D_out), lambda i: (i, 0)),
        ),
        compiler_params=pltpu.CompilerParams(
            dimension_semantics=("parallel",),
            # 32 MiB: covers tile_b up to ~2048 and is within physical VMEM on
            # v5e/v6e/v7x (raises v5e's 16 MiB default scoped limit).
            vmem_limit_bytes=32 * 1024 * 1024,
        ),
    )(x, w1_bf16, b1_2d, w2_bf16, b2_2d)

    return out


def init_params(key):
    """Deterministic init mimicking nn.Linear's uniform(-1/sqrt(fan_in), 1/sqrt(fan_in))."""
    k1, k2, k3, k4 = jax.random.split(key, 4)
    bound1 = 1.0 / jnp.sqrt(768.0)
    bound2 = 1.0 / jnp.sqrt(512.0)
    # Stored as (in, out) = transpose of PyTorch's (out, in) weight layout.
    w1 = jax.random.uniform(k1, (768, 512), jnp.float32, -bound1, bound1)
    b1 = jax.random.uniform(k2, (512,), jnp.float32, -bound1, bound1)
    w2 = jax.random.uniform(k3, (512, 256), jnp.float32, -bound2, bound2)
    b2 = jax.random.uniform(k4, (256,), jnp.float32, -bound2, bound2)
    return w1, b1, w2, b2


def _ref(x, w1, b1, w2, b2):
    # Pure-JAX f32 reference of the PyTorch module.
    return jnp.maximum(x @ w1 + b1, 0.0) @ w2 + b2


if __name__ == "__main__":
    key = jax.random.PRNGKey(0)
    kx, kx2, kp = jax.random.split(key, 3)
    w1, b1, w2, b2 = init_params(kp)
    pw1, pb1, pw2, pb2 = prepare_params(w1, b1, w2, b2)   # one-time cast/reshape

    # Small aligned batch.
    B = 8
    x = jax.random.normal(kx, (B, 768), jnp.float32)
    out = jax.block_until_ready(custom_llm_model(x, pw1, pb1, pw2, pb2))
    ref = _ref(x, w1, b1, w2, b2)
    assert out.shape == (B, 256)
    # bf16 MXU operands with f32 accumulation: loosen tolerance vs f32 ref.
    assert jnp.allclose(out, ref, atol=3e-2, rtol=3e-2)

    # Ragged batch (exercises the masked-final-tile path, no wrapper padding).
    B2 = 20
    x2 = jax.random.normal(kx2, (B2, 768), jnp.float32)
    out2 = jax.block_until_ready(custom_llm_model(x2, pw1, pb1, pw2, pb2))
    ref2 = _ref(x2, w1, b1, w2, b2)
    assert out2.shape == (B2, 256)
    assert jnp.allclose(out2, ref2, atol=3e-2, rtol=3e-2)

    print("KERNEL_OK")
</pallas_src>

<mosaic_0001>
module attributes {stable_mosaic.version = 11 : i64} {
  func.func @mlp_kernel(%arg0: i32, %arg1: memref<8x768xf32, #tpu.memory_space<vmem>>, %arg2: memref<768x512xbf16, #tpu.memory_space<vmem>>, %arg3: memref<1x512xf32, #tpu.memory_space<vmem>>, %arg4: memref<512x256xbf16, #tpu.memory_space<vmem>>, %arg5: memref<1x256xf32, #tpu.memory_space<vmem>>, %arg6: memref<8x256xf32, #tpu.memory_space<vmem>>) attributes {dimension_semantics = [#tpu.dimension_semantics<parallel>], iteration_bounds = array<i64: 1>, scalar_prefetch = 0 : i64, scratch_operands = 0 : i64, tpu.core_type = #tpu.core_type<tc>, window_params = [{transform_indices = @transform_0, window_bounds = array<i64: 8, 768>}, {pipeline_mode = #tpu.pipeline_mode<synchronous>, transform_indices = @transform_1, window_bounds = array<i64: 768, 512>}, {pipeline_mode = #tpu.pipeline_mode<synchronous>, transform_indices = @transform_2, window_bounds = array<i64: 1, 512>}, {pipeline_mode = #tpu.pipeline_mode<synchronous>, transform_indices = @transform_3, window_bounds = array<i64: 512, 256>}, {pipeline_mode = #tpu.pipeline_mode<synchronous>, transform_indices = @transform_4, window_bounds = array<i64: 1, 256>}, {transform_indices = @transform_5, window_bounds = array<i64: 8, 256>}]} {
    %c0 = arith.constant 0 : index
    %c0_0 = arith.constant 0 : index
    %0 = vector.load %arg1[%c0, %c0_0] : memref<8x768xf32, #tpu.memory_space<vmem>>, vector<8x768xf32>
    %1 = arith.truncf %0 : vector<8x768xf32> to vector<8x768xbf16>
    %c0_1 = arith.constant 0 : index
    %c0_2 = arith.constant 0 : index
    %2 = vector.load %arg2[%c0_1, %c0_2] : memref<768x512xbf16, #tpu.memory_space<vmem>>, vector<768x512xbf16>
    %cst = arith.constant dense<0.000000e+00> : vector<8x512xf32>
    %3 = tpu.matmul %1, %2, %cst {dimension_numbers = #tpu.dot_dimension_numbers<[1], [0], [0], [1], [0, 0, 1, 1], [], []>} : vector<8x768xbf16>, vector<768x512xbf16>, vector<8x512xf32> -> vector<8x512xf32>
    %c0_3 = arith.constant 0 : index
    %c0_4 = arith.constant 0 : index
    %4 = vector.load %arg3[%c0_3, %c0_4] : memref<1x512xf32, #tpu.memory_space<vmem>>, vector<1x512xf32>
    %5 = vector.broadcast %4 : vector<1x512xf32> to vector<8x512xf32>
    %6 = arith.addf %3, %5 : vector<8x512xf32>
    %cst_5 = arith.constant 0.000000e+00 : f32
    %7 = vector.broadcast %cst_5 : f32 to vector<8x512xf32>
    %8 = arith.maximumf %6, %7 : vector<8x512xf32>
    %9 = arith.truncf %8 : vector<8x512xf32> to vector<8x512xbf16>
    %c0_6 = arith.constant 0 : index
    %c0_7 = arith.constant 0 : index
    %10 = vector.load %arg4[%c0_6, %c0_7] : memref<512x256xbf16, #tpu.memory_space<vmem>>, vector<512x256xbf16>
    %cst_8 = arith.constant dense<0.000000e+00> : vector<8x256xf32>
    %11 = tpu.matmul %9, %10, %cst_8 {dimension_numbers = #tpu.dot_dimension_numbers<[1], [0], [0], [1], [0, 0, 1, 1], [], []>} : vector<8x512xbf16>, vector<512x256xbf16>, vector<8x256xf32> -> vector<8x256xf32>
    %c0_9 = arith.constant 0 : index
    %c0_10 = arith.constant 0 : index
    %12 = vector.load %arg5[%c0_9, %c0_10] : memref<1x256xf32, #tpu.memory_space<vmem>>, vector<1x256xf32>
    %13 = vector.broadcast %12 : vector<1x256xf32> to vector<8x256xf32>
    %14 = arith.addf %11, %13 : vector<8x256xf32>
    %c0_11 = arith.constant 0 : index
    %c0_12 = arith.constant 0 : index
    %15 = vector.load %arg6[%c0_11, %c0_12] : memref<8x256xf32, #tpu.memory_space<vmem>>, vector<8x256xf32>
    tpu.vector_store %arg6[%c0_11, %c0_12], %14 {strides = array<i32>} : memref<8x256xf32, #tpu.memory_space<vmem>>, vector<8x256xf32>,
    return
  }
  func.func @transform_0(%arg0: i32) -> (i32, i32) {
    %c0_i32 = arith.constant 0 : i32
    %c0_i32_0 = arith.constant 0 : i32
    return %arg0, %c0_i32 : i32, i32
  }
  func.func @transform_1(%arg0: i32) -> (i32, i32) {
    %c0_i32 = arith.constant 0 : i32
    %c0_i32_0 = arith.constant 0 : i32
    %c0_i32_1 = arith.constant 0 : i32
    return %c0_i32, %c0_i32_0 : i32, i32
  }
  func.func @transform_2(%arg0: i32) -> (i32, i32) {
    %c0_i32 = arith.constant 0 : i32
    %c0_i32_0 = arith.constant 0 : i32
    %c0_i32_1 = arith.constant 0 : i32
    return %c0_i32, %c0_i32_0 : i32, i32
  }
  func.func @transform_3(%arg0: i32) -> (i32, i32) {
    %c0_i32 = arith.constant 0 : i32
    %c0_i32_0 = arith.constant 0 : i32
    %c0_i32_1 = arith.constant 0 : i32
    return %c0_i32, %c0_i32_0 : i32, i32
  }
  func.func @transform_4(%arg0: i32) -> (i32, i32) {
    %c0_i32 = arith.constant 0 : i32
    %c0_i32_0 = arith.constant 0 : i32
    %c0_i32_1 = arith.constant 0 : i32
    return %c0_i32, %c0_i32_0 : i32, i32
  }
  func.func @transform_5(%arg0: i32) -> (i32, i32) {
    %c0_i32 = arith.constant 0 : i32
    %c0_i32_0 = arith.constant 0 : i32
    return %arg0, %c0_i32 : i32, i32
  }
}

</mosaic_0001>

<llo_original>
// kernel: tpu_custom_call.1
$region0: #{tpu_custom_call.1}
  #allocation0 [shape = 'u32[]', space=smem, size = 0x4, offset = 0x4, fixed_abs, tag = 'smem constant byte address 0x4 - core index']
  #allocation1 [shape = 'u32[72,128]{1,0:T(1,128)}', space=vmem, size = 0x9000, scoped, tag = 'internal scratch']
  %s0 = inlined_call_operand.hbm [shape: f32[8,768], index: 0, kind: input, shape index: {}]
  %s1 = inlined_call_operand.hbm [shape: bf16[768,512], index: 1, kind: input, shape index: {}]
  %s2 = inlined_call_operand.hbm [shape: f32[1,512], index: 2, kind: input, shape index: {}]
  %s3 = inlined_call_operand.hbm [shape: bf16[512,256], index: 3, kind: input, shape index: {}]
  %s4 = inlined_call_operand.vmem [shape: f32[1,256], index: 4, kind: input, shape index: {}]
  %s5 = inlined_call_operand.hbm [shape: f32[8,256], index: 5, kind: output, shape index: {}]
  %s6 = sld [smem:[#allocation0]]
  $region46: #{tpu_custom_call.1} parent=0
    _
  %s8 = ssub.s32 1, %s6
  %s9 = scalar_select 0, %s8, %s6
  $region1: #{tpu_custom_call.1} parent=0
    #allocation2 [shape = 'u8[24576]{0}', space=vmem, size = 0x6000, scoped, tag = 'input window, operand 0, single buffered']
    #allocation3 [shape = 's32[1]{0}', space=sflag, size = 0x4, scoped, tag = 'scoped memory for tpu_custom_call.1']
    #allocation4 [shape = 's32[1]{0}', space=sflag, size = 0x4, scoped, tag = 'scoped memory for tpu_custom_call.1']
    #allocation5 [shape = 'u8[786432]{0}', space=vmem, size = 0xc0000, scoped, tag = 'input window, operand 1, single buffered']
    #allocation6 [shape = 's32[1]{0}', space=sflag, size = 0x4, scoped, tag = 'scoped memory for tpu_custom_call.1']
    #allocation7 [shape = 'u8[2048]{0}', space=vmem, size = 0x800, scoped, tag = 'input window, operand 2, single buffered']
    #allocation8 [shape = 'u8[262144]{0}', space=vmem, size = 0x40000, scoped, tag = 'input window, operand 3, single buffered']
    #allocation9 [shape = 's32[1]{0}', space=sflag, size = 0x4, scoped, tag = 'scoped memory for tpu_custom_call.1']
    #allocation10 [shape = 'u8[8192]{0}', space=vmem, size = 0x2000, scoped, tag = 'output window, operand 0, single buffered']
    %10 = vsyncpa [#allocation3], 0
    %11 = vsyncpa [#allocation6], 0
    %12 = vsyncpa [#allocation9], 0
    %13 = vsyncpa [#allocation4], 0
    // Predicated region
    $region2: #{tpu_custom_call.1} parent=1 // pred_check
      _
    $region3: #{tpu_custom_call.1} parent=1 // pred_check_branch
      %15 = sbr.rel (0) target = $region5
    $region4: #{tpu_custom_call.1} parent=1 // pred_region
      %17 = vsyncadd [#allocation3], 0
      %s19 = sshll.u32 %s0, 4
      %s20 = int_to_ptr.hbm [resolvable:$true] %s19
      %s21 = sshll.u32 [#allocation2], 4
      %s22 = int_to_ptr.vmem [resolvable:$true] %s21
      %24 = dma.hbm_to_vmem [thread:$0]  %s20, 768, %s22, [#allocation3]
    $region5: #{tpu_custom_call.1} parent=1 // pred_fallthru
      _
    // Predicated region
    $region6: #{tpu_custom_call.1} parent=1 // pred_check
      _
    $region7: #{tpu_custom_call.1} parent=1 // pred_check_branch
      %26 = sbr.rel (0) target = $region9
    $region8: #{tpu_custom_call.1} parent=1 // pred_region
      %28 = vsyncadd [#allocation6], 0
      %s29 = sshll.u32 %s1, 4
      %s30 = int_to_ptr.hbm [resolvable:$true] %s29
      %s31 = sshll.u32 [#allocation5], 4
      %s32 = int_to_ptr.vmem [resolvable:$true] %s31
      %37 = dma.hbm_to_vmem [thread:$0]  %s30, 24576, %s32, [#allocation6], 256, 256, 16
    $region9: #{tpu_custom_call.1} parent=1 // pred_fallthru
      _
    // Predicated region
    $region10: #{tpu_custom_call.1} parent=1 // pred_check
      _
    $region11: #{tpu_custom_call.1} parent=1 // pred_check_branch
      %39 = sbr.rel (0) target = $region13
    $region12: #{tpu_custom_call.1} parent=1 // pred_region
      %41 = vsyncadd [#allocation6], 0
      %s43 = sshll.u32 %s2, 4
      %s44 = int_to_ptr.hbm [resolvable:$true] %s43
      %s45 = sshll.u32 [#allocation7], 4
      %s46 = int_to_ptr.vmem [resolvable:$true] %s45
      %48 = dma.hbm_to_vmem [thread:$0]  %s44, 64, %s46, [#allocation6]
    $region13: #{tpu_custom_call.1} parent=1 // pred_fallthru
      _
    // Predicated region
    $region14: #{tpu_custom_call.1} parent=1 // pred_check
      _
    $region15: #{tpu_custom_call.1} parent=1 // pred_check_branch
      %50 = sbr.rel (0) target = $region17
    $region16: #{tpu_custom_call.1} parent=1 // pred_region
      %52 = vsyncadd [#allocation9], 0
      %s53 = sshll.u32 %s3, 4
      %s54 = int_to_ptr.hbm [resolvable:$true] %s53
      %s55 = sshll.u32 [#allocation8], 4
      %s56 = int_to_ptr.vmem [resolvable:$true] %s55
      %61 = dma.hbm_to_vmem [thread:$0]  %s54, 8192, %s56, [#allocation9], 128, 128, 8
    $region17: #{tpu_custom_call.1} parent=1 // pred_fallthru
      _
    // Predicated region
    $region18: #{tpu_custom_call.1} parent=1 // pred_check
      _
    $region19: #{tpu_custom_call.1} parent=1 // pred_check_branch
      %63 = sbr.rel (0) target = $region21
    $region20: #{tpu_custom_call.1} parent=1 // pred_region
      _
    $region21: #{tpu_custom_call.1} parent=1 // pred_fallthru
      _
    // Predicated region
    $region22: #{tpu_custom_call.1} parent=1 // pred_check
      _
    $region23: #{tpu_custom_call.1} parent=1 // pred_check_branch
      %65 = sbr.rel (0) target = $region25
    $region24: #{tpu_custom_call.1} parent=1 // pred_region
      %67 = dma.done [#allocation3], 768
    $region25: #{tpu_custom_call.1} parent=1 // pred_fallthru
      _
    // Predicated region
    $region26: #{tpu_custom_call.1} parent=1 // pred_check
      _
    $region27: #{tpu_custom_call.1} parent=1 // pred_check_branch
      %69 = sbr.rel (0) target = $region29
    $region28: #{tpu_custom_call.1} parent=1 // pred_region
      %71 = dma.done [#allocation6], 24576
    $region29: #{tpu_custom_call.1} parent=1 // pred_fallthru
      _
    // Predicated region
    $region30: #{tpu_custom_call.1} parent=1 // pred_check
      _
    $region31: #{tpu_custom_call.1} parent=1 // pred_check_branch
      %73 = sbr.rel (0) target = $region33
    $region32: #{tpu_custom_call.1} parent=1 // pred_region
      %75 = dma.done [#allocation6], 64
    $region33: #{tpu_custom_call.1} parent=1 // pred_fallthru
      _
    // Predicated region
    $region34: #{tpu_custom_call.1} parent=1 // pred_check
      _
    $region35: #{tpu_custom_call.1} parent=1 // pred_check_branch
      %77 = sbr.rel (0) target = $region37
    $region36: #{tpu_custom_call.1} parent=1 // pred_region
      %79 = dma.done [#allocation9], 8192
    $region37: #{tpu_custom_call.1} parent=1 // pred_fallthru
      _
    %v80 = vld [vmem:[#allocation2] sm:$0xff]
    %v81 = vld [vmem:[#allocation2 + $0x8] sm:$0xff]
    %v82 = vld [vmem:[#allocation2 + $0x10] sm:$0xff]
    %v83 = vld [vmem:[#allocation2 + $0x18] sm:$0xff]
    %v84 = vld [vmem:[#allocation2 + $0x20] sm:$0xff]
    %v85 = vld [vmem:[#allocation2 + $0x28] sm:$0xff]
    %v86 = vpack.c.bf16 %v80, %v80
    %v87 = vpack.c.bf16 %v81, %v81
    %v88 = vpack.c.bf16 %v82, %v82
    %v89 = vpack.c.bf16 %v83, %v83
    %v90 = vpack.c.bf16 %v84, %v84
    %v91 = vpack.c.bf16 %v85, %v85
    %v92 = vld [vmem:[#allocation5] sm:$0xff]
    %v93 = vld [vmem:[#allocation5 + $0x8] sm:$0xff]
    %v94 = vld [vmem:[#allocation5 + $0x10] sm:$0xff]
    %v95 = vld [vmem:[#allocation5 + $0x18] sm:$0xff]
    %v96 = vld [vmem:[#allocation5 + $0x20] sm:$0xff]
    %v97 = vld [vmem:[#allocation5 + $0x28] sm:$0xff]
    %v98 = vld [vmem:[#allocation5 + $0x30] sm:$0xff]
    %v99 = vld [vmem:[#allocation5 + $0x38] sm:$0xff]
    %v100 = vld [vmem:[#allocation5 + $0x40] sm:$0xff]
    %v101 = vld [vmem:[#allocation5 + $0x48] sm:$0xff]
    %v102 = vld [vmem:[#allocation5 + $0x50] sm:$0xff]
    %v103 = vld [vmem:[#allocation5 + $0x58] sm:$0xff]
    %v104 = vld [vmem:[#allocation5 + $0x60] sm:$0xff]
    %v105 = vld [vmem:[#allocation5 + $0x68] sm:$0xff]
    %v106 = vld [vmem:[#allocation5 + $0x70] sm:$0xff]
    %v107 = vld [vmem:[#allocation5 + $0x78] sm:$0xff]
    %v108 = vld [vmem:[#allocation5 + $0x80] sm:$0xff]
    %v109 = vld [vmem:[#allocation5 + $0x88] sm:$0xff]
    %v110 = vld [vmem:[#allocation5 + $0x90] sm:$0xff]
    %v111 = vld [vmem:[#allocation5 + $0x98] sm:$0xff]
    %v112 = vld [vmem:[#allocation5 + $0xa0] sm:$0xff]
    %v113 = vld [vmem:[#allocation5 + $0xa8] sm:$0xff]
    %v114 = vld [vmem:[#allocation5 + $0xb0] sm:$0xff]
    %v115 = vld [vmem:[#allocation5 + $0xb8] sm:$0xff]
    %v116 = vld [vmem:[#allocation5 + $0xc0] sm:$0xff]
    %v117 = vld [vmem:[#allocation5 + $0xc8] sm:$0xff]
    %v118 = vld [vmem:[#allocation5 + $0xd0] sm:$0xff]
    %v119 = vld [vmem:[#allocation5 + $0xd8] sm:$0xff]
    %v120 = vld [vmem:[#allocation5 + $0xe0] sm:$0xff]
    %v121 = vld [vmem:[#allocation5 + $0xe8] sm:$0xff]
    %v122 = vld [vmem:[#allocation5 + $0xf0] sm:$0xff]
    %v123 = vld [vmem:[#allocation5 + $0xf8] sm:$0xff]
    %v124 = vld [vmem:[#allocation5 + $0x100] sm:$0xff]
    %v125 = vld [vmem:[#allocation5 + $0x108] sm:$0xff]
    %v126 = vld [vmem:[#allocation5 + $0x110] sm:$0xff]
    %v127 = vld [vmem:[#allocation5 + $0x118] sm:$0xff]
    %v128 = vld [vmem:[#allocation5 + $0x120] sm:$0xff]
    %v129 = vld [vmem:[#allocation5 + $0x128] sm:$0xff]
    %v130 = vld [vmem:[#allocation5 + $0x130] sm:$0xff]
    %v131 = vld [vmem:[#allocation5 + $0x138] sm:$0xff]
    %v132 = vld [vmem:[#allocation5 + $0x140] sm:$0xff]
    %v133 = vld [vmem:[#allocation5 + $0x148] sm:$0xff]
    %v134 = vld [vmem:[#allocation5 + $0x150] sm:$0xff]
    %v135 = vld [vmem:[#allocation5 + $0x158] sm:$0xff]
    %v136 = vld [vmem:[#allocation5 + $0x160] sm:$0xff]
    %v137 = vld [vmem:[#allocation5 + $0x168] sm:$0xff]
    %v138 = vld [vmem:[#allocation5 + $0x170] sm:$0xff]
    %v139 = vld [vmem:[#allocation5 + $0x178] sm:$0xff]
    %v140 = vld [vmem:[#allocation5 + $0x180] sm:$0xff]
    %v141 = vld [vmem:[#allocation5 + $0x188] sm:$0xff]
    %v142 = vld [vmem:[#allocation5 + $0x190] sm:$0xff]
    %v143 = vld [vmem:[#allocation5 + $0x198] sm:$0xff]
    %v144 = vld [vmem:[#allocation5 + $0x1a0] sm:$0xff]
    %v145 = vld [vmem:[#allocation5 + $0x1a8] sm:$0xff]
    %v146 = vld [vmem:[#allocation5 + $0x1b0] sm:$0xff]
    %v147 = vld [vmem:[#allocation5 + $0x1b8] sm:$0xff]
    %v148 = vld [vmem:[#allocation5 + $0x1c0] sm:$0xff]
    %v149 = vld [vmem:[#allocation5 + $0x1c8] sm:$0xff]
    %v150 = vld [vmem:[#allocation5 + $0x1d0] sm:$0xff]
    %v151 = vld [vmem:[#allocation5 + $0x1d8] sm:$0xff]
    %v152 = vld [vmem:[#allocation5 + $0x1e0] sm:$0xff]
    %v153 = vld [vmem:[#allocation5 + $0x1e8] sm:$0xff]
    %v154 = vld [vmem:[#allocation5 + $0x1f0] sm:$0xff]
    %v155 = vld [vmem:[#allocation5 + $0x1f8] sm:$0xff]
    %v156 = vld [vmem:[#allocation5 + $0x200] sm:$0xff]
    %v157 = vld [vmem:[#allocation5 + $0x208] sm:$0xff]
    %v158 = vld [vmem:[#allocation5 + $0x210] sm:$0xff]
    %v159 = vld [vmem:[#allocation5 + $0x218] sm:$0xff]
    %v160 = vld [vmem:[#allocation5 + $0x220] sm:$0xff]
    %v161 = vld [vmem:[#allocation5 + $0x228] sm:$0xff]
    %v162 = vld [vmem:[#allocation5 + $0x230] sm:$0xff]
    %v163 = vld [vmem:[#allocation5 + $0x238] sm:$0xff]
    %v164 = vld [vmem:[#allocation5 + $0x240] sm:$0xff]
    %v165 = vld [vmem:[#allocation5 + $0x248] sm:$0xff]
    %v166 = vld [vmem:[#allocation5 + $0x250] sm:$0xff]
    %v167 = vld [vmem:[#allocation5 + $0x258] sm:$0xff]
    %v168 = vld [vmem:[#allocation5 + $0x260] sm:$0xff]
    %v169 = vld [vmem:[#allocation5 + $0x268] sm:$0xff]
    %v170 = vld [vmem:[#allocation5 + $0x270] sm:$0xff]
    %v171 = vld [vmem:[#allocation5 + $0x278] sm:$0xff]
    %v172 = vld [vmem:[#allocation5 + $0x280] sm:$0xff]
    %v173 = vld [vmem:[#allocation5 + $0x288] sm:$0xff]
    %v174 = vld [vmem:[#allocation5 + $0x290] sm:$0xff]
    %v175 = vld [vmem:[#allocation5 + $0x298] sm:$0xff]
    %v176 = vld [vmem:[#allocation5 + $0x2a0] sm:$0xff]
    %v177 = vld [vmem:[#allocation5 + $0x2a8] sm:$0xff]
    %v178 = vld [vmem:[#allocation5 + $0x2b0] sm:$0xff]
    %v179 = vld [vmem:[#allocation5 + $0x2b8] sm:$0xff]
    %v180 = vld [vmem:[#allocation5 + $0x2c0] sm:$0xff]
    %v181 = vld [vmem:[#allocation5 + $0x2c8] sm:$0xff]
    %v182 = vld [vmem:[#allocation5 + $0x2d0] sm:$0xff]
    %v183 = vld [vmem:[#allocation5 + $0x2d8] sm:$0xff]
    %v184 = vld [vmem:[#allocation5 + $0x2e0] sm:$0xff]
    %v185 = vld [vmem:[#allocation5 + $0x2e8] sm:$0xff]
    %v186 = vld [vmem:[#allocation5 + $0x2f0] sm:$0xff]
    %v187 = vld [vmem:[#allocation5 + $0x2f8] sm:$0xff]
    %v188 = vld [vmem:[#allocation5 + $0x300] sm:$0xff]
    %v189 = vld [vmem:[#allocation5 + $0x308] sm:$0xff]
    %v190 = vld [vmem:[#allocation5 + $0x310] sm:$0xff]
    %v191 = vld [vmem:[#allocation5 + $0x318] sm:$0xff]
    %v192 = vld [vmem:[#allocation5 + $0x320] sm:$0xff]
    %v193 = vld [vmem:[#allocation5 + $0x328] sm:$0xff]
    %v194 = vld [vmem:[#allocation5 + $0x330] sm:$0xff]
    %v195 = vld [vmem:[#allocation5 + $0x338] sm:$0xff]
    %v196 = vld [vmem:[#allocation5 + $0x340] sm:$0xff]
    %v197 = vld [vmem:[#allocation5 + $0x348] sm:$0xff]
    %v198 = vld [vmem:[#allocation5 + $0x350] sm:$0xff]
    %v199 = vld [vmem:[#allocation5 + $0x358] sm:$0xff]
    %v200 = vld [vmem:[#allocation5 + $0x360] sm:$0xff]
    %v201 = vld [vmem:[#allocation5 + $0x368] sm:$0xff]
    %v202 = vld [vmem:[#allocation5 + $0x370] sm:$0xff]
    %v203 = vld [vmem:[#allocation5 + $0x378] sm:$0xff]
    %v204 = vld [vmem:[#allocation5 + $0x380] sm:$0xff]
    %v205 = vld [vmem:[#allocation5 + $0x388] sm:$0xff]
    %v206 = vld [vmem:[#allocation5 + $0x390] sm:$0xff]
    %v207 = vld [vmem:[#allocation5 + $0x398] sm:$0xff]
    %v208 = vld [vmem:[#allocation5 + $0x3a0] sm:$0xff]
    %v209 = vld [vmem:[#allocation5 + $0x3a8] sm:$0xff]
    %v210 = vld [vmem:[#allocation5 + $0x3b0] sm:$0xff]
    %v211 = vld [vmem:[#allocation5 + $0x3b8] sm:$0xff]
    %v212 = vld [vmem:[#allocation5 + $0x3c0] sm:$0xff]
    %v213 = vld [vmem:[#allocation5 + $0x3c8] sm:$0xff]
    %v214 = vld [vmem:[#allocation5 + $0x3d0] sm:$0xff]
    %v215 = vld [vmem:[#allocation5 + $0x3d8] sm:$0xff]
    %v216 = vld [vmem:[#allocation5 + $0x3e0] sm:$0xff]
    %v217 = vld [vmem:[#allocation5 + $0x3e8] sm:$0xff]
    %v218 = vld [vmem:[#allocation5 + $0x3f0] sm:$0xff]
    %v219 = vld [vmem:[#allocation5 + $0x3f8] sm:$0xff]
    %v220 = vld [vmem:[#allocation5 + $0x400] sm:$0xff]
    %v221 = vld [vmem:[#allocation5 + $0x408] sm:$0xff]
    %v222 = vld [vmem:[#allocation5 + $0x410] sm:$0xff]
    %v223 = vld [vmem:[#allocation5 + $0x418] sm:$0xff]
    %v224 = vld [vmem:[#allocation5 + $0x420] sm:$0xff]
    %v225 = vld [vmem:[#allocation5 + $0x428] sm:$0xff]
    %v226 = vld [vmem:[#allocation5 + $0x430] sm:$0xff]
    %v227 = vld [vmem:[#allocation5 + $0x438] sm:$0xff]
    %v228 = vld [vmem:[#allocation5 + $0x440] sm:$0xff]
    %v229 = vld [vmem:[#allocation5 + $0x448] sm:$0xff]
    %v230 = vld [vmem:[#allocation5 + $0x450] sm:$0xff]
    %v231 = vld [vmem:[#allocation5 + $0x458] sm:$0xff]
    %v232 = vld [vmem:[#allocation5 + $0x460] sm:$0xff]
    %v233 = vld [vmem:[#allocation5 + $0x468] sm:$0xff]
    %v234 = vld [vmem:[#allocation5 + $0x470] sm:$0xff]
    %v235 = vld [vmem:[#allocation5 + $0x478] sm:$0xff]
    %v236 = vld [vmem:[#allocation5 + $0x480] sm:$0xff]
    %v237 = vld [vmem:[#allocation5 + $0x488] sm:$0xff]
    %v238 = vld [vmem:[#allocation5 + $0x490] sm:$0xff]
    %v239 = vld [vmem:[#allocation5 + $0x498] sm:$0xff]
    %v240 = vld [vmem:[#allocation5 + $0x4a0] sm:$0xff]
    %v241 = vld [vmem:[#allocation5 + $0x4a8] sm:$0xff]
    %v242 = vld [vmem:[#allocation5 + $0x4b0] sm:$0xff]
    %v243 = vld [vmem:[#allocation5 + $0x4b8] sm:$0xff]
    %v244 = vld [vmem:[#allocation5 + $0x4c0] sm:$0xff]
    %v245 = vld [vmem:[#allocation5 + $0x4c8] sm:$0xff]
    %v246 = vld [vmem:[#allocation5 + $0x4d0] sm:$0xff]
    %v247 = vld [vmem:[#allocation5 + $0x4d8] sm:$0xff]
    %v248 = vld [vmem:[#allocation5 + $0x4e0] sm:$0xff]
    %v249 = vld [vmem:[#allocation5 + $0x4e8] sm:$0xff]
    %v250 = vld [vmem:[#allocation5 + $0x4f0] sm:$0xff]
    %v251 = vld [vmem:[#allocation5 + $0x4f8] sm:$0xff]
    %v252 = vld [vmem:[#allocation5 + $0x500] sm:$0xff]
    %v253 = vld [vmem:[#allocation5 + $0x508] sm:$0xff]
    %v254 = vld [vmem:[#allocation5 + $0x510] sm:$0xff]
    %v255 = vld [vmem:[#allocation5 + $0x518] sm:$0xff]
    %v256 = vld [vmem:[#allocation5 + $0x520] sm:$0xff]
    %v257 = vld [vmem:[#allocation5 + $0x528] sm:$0xff]
    %v258 = vld [vmem:[#allocation5 + $0x530] sm:$0xff]
    %v259 = vld [vmem:[#allocation5 + $0x538] sm:$0xff]
    %v260 = vld [vmem:[#allocation5 + $0x540] sm:$0xff]
    %v261 = vld [vmem:[#allocation5 + $0x548] sm:$0xff]
    %v262 = vld [vmem:[#allocation5 + $0x550] sm:$0xff]
    %v263 = vld [vmem:[#allocation5 + $0x558] sm:$0xff]
    %v264 = vld [vmem:[#allocation5 + $0x560] sm:$0xff]
    %v265 = vld [vmem:[#allocation5 + $0x568] sm:$0xff]
    %v266 = vld [vmem:[#allocation5 + $0x570] sm:$0xff]
    %v267 = vld [vmem:[#allocation5 + $0x578] sm:$0xff]
    %v268 = vld [vmem:[#allocation5 + $0x580] sm:$0xff]
    %v269 = vld [vmem:[#allocation5 + $0x588] sm:$0xff]
    %v270 = vld [vmem:[#allocation5 + $0x590] sm:$0xff]
    %v271 = vld [vmem:[#allocation5 + $0x598] sm:$0xff]
    %v272 = vld [vmem:[#allocation5 + $0x5a0] sm:$0xff]
    %v273 = vld [vmem:[#allocation5 + $0x5a8] sm:$0xff]
    %v274 = vld [vmem:[#allocation5 + $0x5b0] sm:$0xff]
    %v275 = vld [vmem:[#allocation5 + $0x5b8] sm:$0xff]
    %v276 = vld [vmem:[#allocation5 + $0x5c0] sm:$0xff]
    %v277 = vld [vmem:[#allocation5 + $0x5c8] sm:$0xff]
    %v278 = vld [vmem:[#allocation5 + $0x5d0] sm:$0xff]
    %v279 = vld [vmem:[#allocation5 + $0x5d8] sm:$0xff]
    %v280 = vld [vmem:[#allocation5 + $0x5e0] sm:$0xff]
    %v281 = vld [vmem:[#allocation5 + $0x5e8] sm:$0xff]
    %v282 = vld [vmem:[#allocation5 + $0x5f0] sm:$0xff]
    %v283 = vld [vmem:[#allocation5 + $0x5f8] sm:$0xff]
    %v284 = vld [vmem:[#allocation7] sm:$0xf]
    %v286 = vperm.slane %v284, 0
    %v287 = vperm.slane %v284, 1
    %v288 = vperm.slane %v284, 2
    %v289 = vperm.slane %v284, 3
    %v486 = vunpack.c.l.b16 %v92
    %v487 = vunpack.c.h.b16 %v92
    %v488 = vunpack.c.l.b16 %v93
    %v489 = vunpack.c.h.b16 %v93
    %v490 = vunpack.c.l.b16 %v94
    %v491 = vunpack.c.h.b16 %v94
    %v492 = vunpack.c.l.b16 %v95
    %v493 = vunpack.c.h.b16 %v95
    %v494 = vunpack.c.l.b16 %v96
    %v495 = vunpack.c.h.b16 %v96
    %v496 = vunpack.c.l.b16 %v97
    %v497 = vunpack.c.h.b16 %v97
    %v498 = vunpack.c.l.b16 %v98
    %v499 = vunpack.c.h.b16 %v98
    %v500 = vunpack.c.l.b16 %v99
    %v501 = vunpack.c.h.b16 %v99
    %v502 = vunpack.c.l.b16 %v100
    %v503 = vunpack.c.h.b16 %v100
    %v504 = vunpack.c.l.b16 %v101
    %v505 = vunpack.c.h.b16 %v101
    %v506 = vunpack.c.l.b16 %v102
    %v507 = vunpack.c.h.b16 %v102
    %v508 = vunpack.c.l.b16 %v103
    %v509 = vunpack.c.h.b16 %v103
    %v510 = vunpack.c.l.b16 %v104
    %v511 = vunpack.c.h.b16 %v104
    %v512 = vunpack.c.l.b16 %v105
    %v513 = vunpack.c.h.b16 %v105
    %v514 = vunpack.c.l.b16 %v106
    %v515 = vunpack.c.h.b16 %v106
    %v516 = vunpack.c.l.b16 %v107
    %v517 = vunpack.c.h.b16 %v107
    %v518 = vunpack.c.l.b16 %v108
    %v519 = vunpack.c.h.b16 %v108
    %v520 = vunpack.c.l.b16 %v109
    %v521 = vunpack.c.h.b16 %v109
    %v522 = vunpack.c.l.b16 %v110
    %v523 = vunpack.c.h.b16 %v110
    %v524 = vunpack.c.l.b16 %v111
    %v525 = vunpack.c.h.b16 %v111
    %v526 = vunpack.c.l.b16 %v112
    %v527 = vunpack.c.h.b16 %v112
    %v528 = vunpack.c.l.b16 %v113
    %v529 = vunpack.c.h.b16 %v113
    %v530 = vunpack.c.l.b16 %v114
    %v531 = vunpack.c.h.b16 %v114
    %v532 = vunpack.c.l.b16 %v115
    %v533 = vunpack.c.h.b16 %v115
    %v534 = vunpack.c.l.b16 %v116
    %v535 = vunpack.c.h.b16 %v116
    %v536 = vunpack.c.l.b16 %v117
    %v537 = vunpack.c.h.b16 %v117
    %v538 = vunpack.c.l.b16 %v118
    %v539 = vunpack.c.h.b16 %v118
    %v540 = vunpack.c.l.b16 %v119
    %v541 = vunpack.c.h.b16 %v119
    %v542 = vunpack.c.l.b16 %v120
    %v543 = vunpack.c.h.b16 %v120
    %v544 = vunpack.c.l.b16 %v121
    %v545 = vunpack.c.h.b16 %v121
    %v546 = vunpack.c.l.b16 %v122
    %v547 = vunpack.c.h.b16 %v122
    %v548 = vunpack.c.l.b16 %v123
    %v549 = vunpack.c.h.b16 %v123
    %v550 = vunpack.c.l.b16 %v124
    %v551 = vunpack.c.h.b16 %v124
    %v552 = vunpack.c.l.b16 %v125
    %v553 = vunpack.c.h.b16 %v125
    %v554 = vunpack.c.l.b16 %v126
    %v555 = vunpack.c.h.b16 %v126
    %v556 = vunpack.c.l.b16 %v127
    %v557 = vunpack.c.h.b16 %v127
    %v558 = vunpack.c.l.b16 %v128
    %v559 = vunpack.c.h.b16 %v128
    %v560 = vunpack.c.l.b16 %v129
    %v561 = vunpack.c.h.b16 %v129
    %v562 = vunpack.c.l.b16 %v130
    %v563 = vunpack.c.h.b16 %v130
    %v564 = vunpack.c.l.b16 %v131
    %v565 = vunpack.c.h.b16 %v131
    %v566 = vunpack.c.l.b16 %v132
    %v567 = vunpack.c.h.b16 %v132
    %v568 = vunpack.c.l.b16 %v133
    %v569 = vunpack.c.h.b16 %v133
    %v570 = vunpack.c.l.b16 %v134
    %v571 = vunpack.c.h.b16 %v134
    %v572 = vunpack.c.l.b16 %v135
    %v573 = vunpack.c.h.b16 %v135
    %v574 = vunpack.c.l.b16 %v136
    %v575 = vunpack.c.h.b16 %v136
    %v576 = vunpack.c.l.b16 %v137
    %v577 = vunpack.c.h.b16 %v137
    %v578 = vunpack.c.l.b16 %v138
    %v579 = vunpack.c.h.b16 %v138
    %v580 = vunpack.c.l.b16 %v139
    %v581 = vunpack.c.h.b16 %v139
    %v582 = vunpack.c.l.b16 %v140
    %v583 = vunpack.c.h.b16 %v140
    %v584 = vunpack.c.l.b16 %v141
    %v585 = vunpack.c.h.b16 %v141
    %v586 = vunpack.c.l.b16 %v142
    %v587 = vunpack.c.h.b16 %v142
    %v588 = vunpack.c.l.b16 %v143
    %v589 = vunpack.c.h.b16 %v143
    %v590 = vunpack.c.l.b16 %v144
    %v591 = vunpack.c.h.b16 %v144
    %v592 = vunpack.c.l.b16 %v145
    %v593 = vunpack.c.h.b16 %v145
    %v594 = vunpack.c.l.b16 %v146
    %v595 = vunpack.c.h.b16 %v146
    %v596 = vunpack.c.l.b16 %v147
    %v597 = vunpack.c.h.b16 %v147
    %v598 = vunpack.c.l.b16 %v148
    %v599 = vunpack.c.h.b16 %v148
    %v600 = vunpack.c.l.b16 %v149
    %v601 = vunpack.c.h.b16 %v149
    %v602 = vunpack.c.l.b16 %v150
    %v603 = vunpack.c.h.b16 %v150
    %v604 = vunpack.c.l.b16 %v151
    %v605 = vunpack.c.h.b16 %v151
    %v606 = vunpack.c.l.b16 %v152
    %v607 = vunpack.c.h.b16 %v152
    %v608 = vunpack.c.l.b16 %v153
    %v609 = vunpack.c.h.b16 %v153
    %v610 = vunpack.c.l.b16 %v154
    %v611 = vunpack.c.h.b16 %v154
    %v612 = vunpack.c.l.b16 %v155
    %v613 = vunpack.c.h.b16 %v155
    %v614 = vunpack.c.l.b16 %v156
    %v615 = vunpack.c.h.b16 %v156
    %v616 = vunpack.c.l.b16 %v157
    %v617 = vunpack.c.h.b16 %v157
    %v618 = vunpack.c.l.b16 %v158
    %v619 = vunpack.c.h.b16 %v158
    %v620 = vunpack.c.l.b16 %v159
    %v621 = vunpack.c.h.b16 %v159
    %v622 = vunpack.c.l.b16 %v160
    %v623 = vunpack.c.h.b16 %v160
    %v624 = vunpack.c.l.b16 %v161
    %v625 = vunpack.c.h.b16 %v161
    %v626 = vunpack.c.l.b16 %v162
    %v627 = vunpack.c.h.b16 %v162
    %v628 = vunpack.c.l.b16 %v163
    %v629 = vunpack.c.h.b16 %v163
    %v630 = vunpack.c.l.b16 %v164
    %v631 = vunpack.c.h.b16 %v164
    %v632 = vunpack.c.l.b16 %v165
    %v633 = vunpack.c.h.b16 %v165
    %v634 = vunpack.c.l.b16 %v166
    %v635 = vunpack.c.h.b16 %v166
    %v636 = vunpack.c.l.b16 %v167
    %v637 = vunpack.c.h.b16 %v167
    %v638 = vunpack.c.l.b16 %v168
    %v639 = vunpack.c.h.b16 %v168
    %v640 = vunpack.c.l.b16 %v169
    %v641 = vunpack.c.h.b16 %v169
    %v642 = vunpack.c.l.b16 %v170
    %v643 = vunpack.c.h.b16 %v170
    %v644 = vunpack.c.l.b16 %v171
    %v645 = vunpack.c.h.b16 %v171
    %v646 = vunpack.c.l.b16 %v172
    %v647 = vunpack.c.h.b16 %v172
    %v648 = vunpack.c.l.b16 %v173
    %v649 = vunpack.c.h.b16 %v173
    %v650 = vunpack.c.l.b16 %v174
    %v651 = vunpack.c.h.b16 %v174
    %v652 = vunpack.c.l.b16 %v175
    %v653 = vunpack.c.h.b16 %v175
    %v654 = vunpack.c.l.b16 %v176
    %v655 = vunpack.c.h.b16 %v176
    %v656 = vunpack.c.l.b16 %v177
    %v657 = vunpack.c.h.b16 %v177
    %v658 = vunpack.c.l.b16 %v178
    %v659 = vunpack.c.h.b16 %v178
    %v660 = vunpack.c.l.b16 %v179
    %v661 = vunpack.c.h.b16 %v179
    %v662 = vunpack.c.l.b16 %v180
    %v663 = vunpack.c.h.b16 %v180
    %v664 = vunpack.c.l.b16 %v181
    %v665 = vunpack.c.h.b16 %v181
    %v666 = vunpack.c.l.b16 %v182
    %v667 = vunpack.c.h.b16 %v182
    %v668 = vunpack.c.l.b16 %v183
    %v669 = vunpack.c.h.b16 %v183
    %v670 = vunpack.c.l.b16 %v184
    %v671 = vunpack.c.h.b16 %v184
    %v672 = vunpack.c.l.b16 %v185
    %v673 = vunpack.c.h.b16 %v185
    %v674 = vunpack.c.l.b16 %v186
    %v675 = vunpack.c.h.b16 %v186
    %v676 = vunpack.c.l.b16 %v187
    %v677 = vunpack.c.h.b16 %v187
    %v678 = vunpack.c.l.b16 %v188
    %v679 = vunpack.c.h.b16 %v188
    %v680 = vunpack.c.l.b16 %v189
    %v681 = vunpack.c.h.b16 %v189
    %v682 = vunpack.c.l.b16 %v190
    %v683 = vunpack.c.h.b16 %v190
    %v684 = vunpack.c.l.b16 %v191
    %v685 = vunpack.c.h.b16 %v191
    %v686 = vunpack.c.l.b16 %v192
    %v687 = vunpack.c.h.b16 %v192
    %v688 = vunpack.c.l.b16 %v193
    %v689 = vunpack.c.h.b16 %v193
    %v690 = vunpack.c.l.b16 %v194
    %v691 = vunpack.c.h.b16 %v194
    %v692 = vunpack.c.l.b16 %v195
    %v693 = vunpack.c.h.b16 %v195
    %v694 = vunpack.c.l.b16 %v196
    %v695 = vunpack.c.h.b16 %v196
    %v696 = vunpack.c.l.b16 %v197
    %v697 = vunpack.c.h.b16 %v197
    %v698 = vunpack.c.l.b16 %v198
    %v699 = vunpack.c.h.b16 %v198
    %v700 = vunpack.c.l.b16 %v199
    %v701 = vunpack.c.h.b16 %v199
    %v702 = vunpack.c.l.b16 %v200
    %v703 = vunpack.c.h.b16 %v200
    %v704 = vunpack.c.l.b16 %v201
    %v705 = vunpack.c.h.b16 %v201
    %v706 = vunpack.c.l.b16 %v202
    %v707 = vunpack.c.h.b16 %v202
    %v708 = vunpack.c.l.b16 %v203
    %v709 = vunpack.c.h.b16 %v203
    %v710 = vunpack.c.l.b16 %v204
    %v711 = vunpack.c.h.b16 %v204
    %v712 = vunpack.c.l.b16 %v205
    %v713 = vunpack.c.h.b16 %v205
    %v714 = vunpack.c.l.b16 %v206
    %v715 = vunpack.c.h.b16 %v206
    %v716 = vunpack.c.l.b16 %v207
    %v717 = vunpack.c.h.b16 %v207
    %v718 = vunpack.c.l.b16 %v208
    %v719 = vunpack.c.h.b16 %v208
    %v720 = vunpack.c.l.b16 %v209
    %v721 = vunpack.c.h.b16 %v209
    %v722 = vunpack.c.l.b16 %v210
    %v723 = vunpack.c.h.b16 %v210
    %v724 = vunpack.c.l.b16 %v211
    %v725 = vunpack.c.h.b16 %v211
    %v726 = vunpack.c.l.b16 %v212
    %v727 = vunpack.c.h.b16 %v212
    %v728 = vunpack.c.l.b16 %v213
    %v729 = vunpack.c.h.b16 %v213
    %v730 = vunpack.c.l.b16 %v214
    %v731 = vunpack.c.h.b16 %v214
    %v732 = vunpack.c.l.b16 %v215
    %v733 = vunpack.c.h.b16 %v215
    %v734 = vunpack.c.l.b16 %v216
    %v735 = vunpack.c.h.b16 %v216
    %v736 = vunpack.c.l.b16 %v217
    %v737 = vunpack.c.h.b16 %v217
    %v738 = vunpack.c.l.b16 %v218
    %v739 = vunpack.c.h.b16 %v218
    %v740 = vunpack.c.l.b16 %v219
    %v741 = vunpack.c.h.b16 %v219
    %v742 = vunpack.c.l.b16 %v220
    %v743 = vunpack.c.h.b16 %v220
    %v744 = vunpack.c.l.b16 %v221
    %v745 = vunpack.c.h.b16 %v221
    %v746 = vunpack.c.l.b16 %v222
    %v747 = vunpack.c.h.b16 %v222
    %v748 = vunpack.c.l.b16 %v223
    %v749 = vunpack.c.h.b16 %v223
    %v750 = vunpack.c.l.b16 %v224
    %v751 = vunpack.c.h.b16 %v224
    %v752 = vunpack.c.l.b16 %v225
    %v753 = vunpack.c.h.b16 %v225
    %v754 = vunpack.c.l.b16 %v226
    %v755 = vunpack.c.h.b16 %v226
    %v756 = vunpack.c.l.b16 %v227
    %v757 = vunpack.c.h.b16 %v227
    %v758 = vunpack.c.l.b16 %v228
    %v759 = vunpack.c.h.b16 %v228
    %v760 = vunpack.c.l.b16 %v229
    %v761 = vunpack.c.h.b16 %v229
    %v762 = vunpack.c.l.b16 %v230
    %v763 = vunpack.c.h.b16 %v230
    %v764 = vunpack.c.l.b16 %v231
    %v765 = vunpack.c.h.b16 %v231
    %v766 = vunpack.c.l.b16 %v232
    %v767 = vunpack.c.h.b16 %v232
    %v768 = vunpack.c.l.b16 %v233
    %v769 = vunpack.c.h.b16 %v233
    %v770 = vunpack.c.l.b16 %v234
    %v771 = vunpack.c.h.b16 %v234
    %v772 = vunpack.c.l.b16 %v235
    %v773 = vunpack.c.h.b16 %v235
    %v774 = vunpack.c.l.b16 %v236
    %v775 = vunpack.c.h.b16 %v236
    %v776 = vunpack.c.l.b16 %v237
    %v777 = vunpack.c.h.b16 %v237
    %v778 = vunpack.c.l.b16 %v238
    %v779 = vunpack.c.h.b16 %v238
    %v780 = vunpack.c.l.b16 %v239
    %v781 = vunpack.c.h.b16 %v239
    %v782 = vunpack.c.l.b16 %v240
    %v783 = vunpack.c.h.b16 %v240
    %v784 = vunpack.c.l.b16 %v241
    %v785 = vunpack.c.h.b16 %v241
    %v786 = vunpack.c.l.b16 %v242
    %v787 = vunpack.c.h.b16 %v242
    %v788 = vunpack.c.l.b16 %v243
    %v789 = vunpack.c.h.b16 %v243
    %v790 = vunpack.c.l.b16 %v244
    %v791 = vunpack.c.h.b16 %v244
    %v792 = vunpack.c.l.b16 %v245
    %v793 = vunpack.c.h.b16 %v245
    %v794 = vunpack.c.l.b16 %v246
    %v795 = vunpack.c.h.b16 %v246
    %v796 = vunpack.c.l.b16 %v247
    %v797 = vunpack.c.h.b16 %v247
    %v798 = vunpack.c.l.b16 %v248
    %v799 = vunpack.c.h.b16 %v248
    %v800 = vunpack.c.l.b16 %v249
    %v801 = vunpack.c.h.b16 %v249
    %v802 = vunpack.c.l.b16 %v250
    %v803 = vunpack.c.h.b16 %v250
    %v804 = vunpack.c.l.b16 %v251
    %v805 = vunpack.c.h.b16 %v251
    %v806 = vunpack.c.l.b16 %v252
    %v807 = vunpack.c.h.b16 %v252
    %v808 = vunpack.c.l.b16 %v253
    %v809 = vunpack.c.h.b16 %v253
    %v810 = vunpack.c.l.b16 %v254
    %v811 = vunpack.c.h.b16 %v254
    %v812 = vunpack.c.l.b16 %v255
    %v813 = vunpack.c.h.b16 %v255
    %v814 = vunpack.c.l.b16 %v256
    %v815 = vunpack.c.h.b16 %v256
    %v816 = vunpack.c.l.b16 %v257
    %v817 = vunpack.c.h.b16 %v257
    %v818 = vunpack.c.l.b16 %v258
    %v819 = vunpack.c.h.b16 %v258
    %v820 = vunpack.c.l.b16 %v259
    %v821 = vunpack.c.h.b16 %v259
    %v822 = vunpack.c.l.b16 %v260
    %v823 = vunpack.c.h.b16 %v260
    %v824 = vunpack.c.l.b16 %v261
    %v825 = vunpack.c.h.b16 %v261
    %v826 = vunpack.c.l.b16 %v262
    %v827 = vunpack.c.h.b16 %v262
    %v828 = vunpack.c.l.b16 %v263
    %v829 = vunpack.c.h.b16 %v263
    %v830 = vunpack.c.l.b16 %v264
    %v831 = vunpack.c.h.b16 %v264
    %v832 = vunpack.c.l.b16 %v265
    %v833 = vunpack.c.h.b16 %v265
    %v834 = vunpack.c.l.b16 %v266
    %v835 = vunpack.c.h.b16 %v266
    %v836 = vunpack.c.l.b16 %v267
    %v837 = vunpack.c.h.b16 %v267
    %v838 = vunpack.c.l.b16 %v268
    %v839 = vunpack.c.h.b16 %v268
    %v840 = vunpack.c.l.b16 %v269
    %v841 = vunpack.c.h.b16 %v269
    %v842 = vunpack.c.l.b16 %v270
    %v843 = vunpack.c.h.b16 %v270
    %v844 = vunpack.c.l.b16 %v271
    %v845 = vunpack.c.h.b16 %v271
    %v846 = vunpack.c.l.b16 %v272
    %v847 = vunpack.c.h.b16 %v272
    %v848 = vunpack.c.l.b16 %v273
    %v849 = vunpack.c.h.b16 %v273
    %v850 = vunpack.c.l.b16 %v274
    %v851 = vunpack.c.h.b16 %v274
    %v852 = vunpack.c.l.b16 %v275
    %v853 = vunpack.c.h.b16 %v275
    %v854 = vunpack.c.l.b16 %v276
    %v855 = vunpack.c.h.b16 %v276
    %v856 = vunpack.c.l.b16 %v277
    %v857 = vunpack.c.h.b16 %v277
    %v858 = vunpack.c.l.b16 %v278
    %v859 = vunpack.c.h.b16 %v278
    %v860 = vunpack.c.l.b16 %v279
    %v861 = vunpack.c.h.b16 %v279
    %v862 = vunpack.c.l.b16 %v280
    %v863 = vunpack.c.h.b16 %v280
    %v864 = vunpack.c.l.b16 %v281
    %v865 = vunpack.c.h.b16 %v281
    %v866 = vunpack.c.l.b16 %v282
    %v867 = vunpack.c.h.b16 %v282
    %v868 = vunpack.c.l.b16 %v283
    %v869 = vunpack.c.h.b16 %v283
    %v870 = vpack.c.b16 %v490, %v486
    %v871 = vpack.c.b16 %v491, %v487
    %v872 = vpack.c.b16 %v492, %v488
    %v873 = vpack.c.b16 %v493, %v489
    %v874 = vpack.c.b16 %v498, %v494
    %v875 = vpack.c.b16 %v499, %v495
    %v876 = vpack.c.b16 %v500, %v496
    %v877 = vpack.c.b16 %v501, %v497
    %v878 = vpack.c.b16 %v506, %v502
    %v879 = vpack.c.b16 %v507, %v503
    %v880 = vpack.c.b16 %v508, %v504
    %v881 = vpack.c.b16 %v509, %v505
    %v882 = vpack.c.b16 %v514, %v510
    %v883 = vpack.c.b16 %v515, %v511
    %v884 = vpack.c.b16 %v516, %v512
    %v885 = vpack.c.b16 %v517, %v513
    %v886 = vpack.c.b16 %v522, %v518
    %v887 = vpack.c.b16 %v523, %v519
    %v888 = vpack.c.b16 %v524, %v520
    %v889 = vpack.c.b16 %v525, %v521
    %v890 = vpack.c.b16 %v530, %v526
    %v891 = vpack.c.b16 %v531, %v527
    %v892 = vpack.c.b16 %v532, %v528
    %v893 = vpack.c.b16 %v533, %v529
    %v894 = vpack.c.b16 %v538, %v534
    %v895 = vpack.c.b16 %v539, %v535
    %v896 = vpack.c.b16 %v540, %v536
    %v897 = vpack.c.b16 %v541, %v537
    %v898 = vpack.c.b16 %v546, %v542
    %v899 = vpack.c.b16 %v547, %v543
    %v900 = vpack.c.b16 %v548, %v544
    %v901 = vpack.c.b16 %v549, %v545
    %v902 = vpack.c.b16 %v554, %v550
    %v903 = vpack.c.b16 %v555, %v551
    %v904 = vpack.c.b16 %v556, %v552
    %v905 = vpack.c.b16 %v557, %v553
    %v906 = vpack.c.b16 %v562, %v558
    %v907 = vpack.c.b16 %v563, %v559
    %v908 = vpack.c.b16 %v564, %v560
    %v909 = vpack.c.b16 %v565, %v561
    %v910 = vpack.c.b16 %v570, %v566
    %v911 = vpack.c.b16 %v571, %v567
    %v912 = vpack.c.b16 %v572, %v568
    %v913 = vpack.c.b16 %v573, %v569
    %v914 = vpack.c.b16 %v578, %v574
    %v915 = vpack.c.b16 %v579, %v575
    %v916 = vpack.c.b16 %v580, %v576
    %v917 = vpack.c.b16 %v581, %v577
    %v918 = vpack.c.b16 %v586, %v582
    %v919 = vpack.c.b16 %v587, %v583
    %v920 = vpack.c.b16 %v588, %v584
    %v921 = vpack.c.b16 %v589, %v585
    %v922 = vpack.c.b16 %v594, %v590
    %v923 = vpack.c.b16 %v595, %v591
    %v924 = vpack.c.b16 %v596, %v592
    %v925 = vpack.c.b16 %v597, %v593
    %v926 = vpack.c.b16 %v602, %v598
    %v927 = vpack.c.b16 %v603, %v599
    %v928 = vpack.c.b16 %v604, %v600
    %v929 = vpack.c.b16 %v605, %v601
    %v930 = vpack.c.b16 %v610, %v606
    %v931 = vpack.c.b16 %v611, %v607
    %v932 = vpack.c.b16 %v612, %v608
    %v933 = vpack.c.b16 %v613, %v609
    %v934 = vpack.c.b16 %v618, %v614
    %v935 = vpack.c.b16 %v619, %v615
    %v936 = vpack.c.b16 %v620, %v616
    %v937 = vpack.c.b16 %v621, %v617
    %v938 = vpack.c.b16 %v626, %v622
    %v939 = vpack.c.b16 %v627, %v623
    %v940 = vpack.c.b16 %v628, %v624
    %v941 = vpack.c.b16 %v629, %v625
    %v942 = vpack.c.b16 %v634, %v630
    %v943 = vpack.c.b16 %v635, %v631
    %v944 = vpack.c.b16 %v636, %v632
    %v945 = vpack.c.b16 %v637, %v633
    %v946 = vpack.c.b16 %v642, %v638
    %v947 = vpack.c.b16 %v643, %v639
    %v948 = vpack.c.b16 %v644, %v640
    %v949 = vpack.c.b16 %v645, %v641
    %v950 = vpack.c.b16 %v650, %v646
    %v951 = vpack.c.b16 %v651, %v647
    %v952 = vpack.c.b16 %v652, %v648
    %v953 = vpack.c.b16 %v653, %v649
    %v954 = vpack.c.b16 %v658, %v654
    %v955 = vpack.c.b16 %v659, %v655
    %v956 = vpack.c.b16 %v660, %v656
    %v957 = vpack.c.b16 %v661, %v657
    %v958 = vpack.c.b16 %v666, %v662
    %v959 = vpack.c.b16 %v667, %v663
    %v960 = vpack.c.b16 %v668, %v664
    %v961 = vpack.c.b16 %v669, %v665
    %v962 = vpack.c.b16 %v674, %v670
    %v963 = vpack.c.b16 %v675, %v671
    %v964 = vpack.c.b16 %v676, %v672
    %v965 = vpack.c.b16 %v677, %v673
    %v966 = vpack.c.b16 %v682, %v678
    %v967 = vpack.c.b16 %v683, %v679
    %v968 = vpack.c.b16 %v684, %v680
    %v969 = vpack.c.b16 %v685, %v681
    %v970 = vpack.c.b16 %v690, %v686
    %v971 = vpack.c.b16 %v691, %v687
    %v972 = vpack.c.b16 %v692, %v688
    %v973 = vpack.c.b16 %v693, %v689
    %v974 = vpack.c.b16 %v698, %v694
    %v975 = vpack.c.b16 %v699, %v695
    %v976 = vpack.c.b16 %v700, %v696
    %v977 = vpack.c.b16 %v701, %v697
    %v978 = vpack.c.b16 %v706, %v702
    %v979 = vpack.c.b16 %v707, %v703
    %v980 = vpack.c.b16 %v708, %v704
    %v981 = vpack.c.b16 %v709, %v705
    %v982 = vpack.c.b16 %v714, %v710
    %v983 = vpack.c.b16 %v715, %v711
    %v984 = vpack.c.b16 %v716, %v712
    %v985 = vpack.c.b16 %v717, %v713
    %v986 = vpack.c.b16 %v722, %v718
    %v987 = vpack.c.b16 %v723, %v719
    %v988 = vpack.c.b16 %v724, %v720
    %v989 = vpack.c.b16 %v725, %v721
    %v990 = vpack.c.b16 %v730, %v726
    %v991 = vpack.c.b16 %v731, %v727
    %v992 = vpack.c.b16 %v732, %v728
    %v993 = vpack.c.b16 %v733, %v729
    %v994 = vpack.c.b16 %v738, %v734
    %v995 = vpack.c.b16 %v739, %v735
    %v996 = vpack.c.b16 %v740, %v736
    %v997 = vpack.c.b16 %v741, %v737
    %v998 = vpack.c.b16 %v746, %v742
    %v999 = vpack.c.b16 %v747, %v743
    %v1000 = vpack.c.b16 %v748, %v744
    %v1001 = vpack.c.b16 %v749, %v745
    %v1002 = vpack.c.b16 %v754, %v750
    %v1003 = vpack.c.b16 %v755, %v751
    %v1004 = vpack.c.b16 %v756, %v752
    %v1005 = vpack.c.b16 %v757, %v753
    %v1006 = vpack.c.b16 %v762, %v758
    %v1007 = vpack.c.b16 %v763, %v759
    %v1008 = vpack.c.b16 %v764, %v760
    %v1009 = vpack.c.b16 %v765, %v761
    %v1010 = vpack.c.b16 %v770, %v766
    %v1011 = vpack.c.b16 %v771, %v767
    %v1012 = vpack.c.b16 %v772, %v768
    %v1013 = vpack.c.b16 %v773, %v769
    %v1014 = vpack.c.b16 %v778, %v774
    %v1015 = vpack.c.b16 %v779, %v775
    %v1016 = vpack.c.b16 %v780, %v776
    %v1017 = vpack.c.b16 %v781, %v777
    %v1018 = vpack.c.b16 %v786, %v782
    %v1019 = vpack.c.b16 %v787, %v783
    %v1020 = vpack.c.b16 %v788, %v784
    %v1021 = vpack.c.b16 %v789, %v785
    %v1022 = vpack.c.b16 %v794, %v790
    %v1023 = vpack.c.b16 %v795, %v791
    %v1024 = vpack.c.b16 %v796, %v792
    %v1025 = vpack.c.b16 %v797, %v793
    %v1026 = vpack.c.b16 %v802, %v798
    %v1027 = vpack.c.b16 %v803, %v799
    %v1028 = vpack.c.b16 %v804, %v800
    %v1029 = vpack.c.b16 %v805, %v801
    %v1030 = vpack.c.b16 %v810, %v806
    %v1031 = vpack.c.b16 %v811, %v807
    %v1032 = vpack.c.b16 %v812, %v808
    %v1033 = vpack.c.b16 %v813, %v809
    %v1034 = vpack.c.b16 %v818, %v814
    %v1035 = vpack.c.b16 %v819, %v815
    %v1036 = vpack.c.b16 %v820, %v816
    %v1037 = vpack.c.b16 %v821, %v817
    %v1038 = vpack.c.b16 %v826, %v822
    %v1039 = vpack.c.b16 %v827, %v823
    %v1040 = vpack.c.b16 %v828, %v824
    %v1041 = vpack.c.b16 %v829, %v825
    %v1042 = vpack.c.b16 %v834, %v830
    %v1043 = vpack.c.b16 %v835, %v831
    %v1044 = vpack.c.b16 %v836, %v832
    %v1045 = vpack.c.b16 %v837, %v833
    %v1046 = vpack.c.b16 %v842, %v838
    %v1047 = vpack.c.b16 %v843, %v839
    %v1048 = vpack.c.b16 %v844, %v840
    %v1049 = vpack.c.b16 %v845, %v841
    %v1050 = vpack.c.b16 %v850, %v846
    %v1051 = vpack.c.b16 %v851, %v847
    %v1052 = vpack.c.b16 %v852, %v848
    %v1053 = vpack.c.b16 %v853, %v849
    %v1054 = vpack.c.b16 %v858, %v854
    %v1055 = vpack.c.b16 %v859, %v855
    %v1056 = vpack.c.b16 %v860, %v856
    %v1057 = vpack.c.b16 %v861, %v857
    %v1058 = vpack.c.b16 %v866, %v862
    %v1059 = vpack.c.b16 %v867, %v863
    %v1060 = vpack.c.b16 %v868, %v864
    %v1061 = vpack.c.b16 %v869, %v865
    %1254 = vmatpush.bf16.msra.mxu0 %v898
    %1255 = vmatpush.bf16.msra.mxu0 %v894
    %1256 = vmatpush.bf16.msra.mxu0 %v890
    %1257 = vmatpush.bf16.msra.mxu0 %v886
    %1258 = vmatpush.bf16.msra.mxu0 %v882
    %1259 = vmatpush.bf16.msra.mxu0 %v878
    %1260 = vmatpush.bf16.msra.mxu0 %v874
    %1261 = vmatpush.bf16.msra.mxu0 %v870
    %1262 = vmatmul.bf16.gmra.mxu0 %v86
    %v1263 = vpop.f32.mrf.mxu0
    %v1264 = vadd.f32 %v286, %v1263
    %v1265 = vpop.f32.mrf.mxu0
    %1266 = vdwg.mxu0
    %1267 = vmatpush.bf16.msra.mxu0 %v930
    %1268 = vmatpush.bf16.msra.mxu0 %v926
    %1269 = vmatpush.bf16.msra.mxu0 %v922
    %1270 = vmatpush.bf16.msra.mxu0 %v918
    %1271 = vmatpush.bf16.msra.mxu0 %v914
    %1272 = vmatpush.bf16.msra.mxu0 %v910
    %1273 = vmatpush.bf16.msra.mxu0 %v906
    %1274 = vmatpush.bf16.msra.mxu0 %v902
    %1275 = vmatmul.bf16.gmra.mxu0 %v87
    %v1276 = vpop.f32.mrf.mxu0
    %v1277 = vadd.f32 %v1264, %v1276
    %v1278 = vpop.f32.mrf.mxu0
    %1279 = vdwg.mxu0
    %1280 = vmatpush.bf16.msra.mxu0 %v962
    %1281 = vmatpush.bf16.msra.mxu0 %v958
    %1282 = vmatpush.bf16.msra.mxu0 %v954
    %1283 = vmatpush.bf16.msra.mxu0 %v950
    %1284 = vmatpush.bf16.msra.mxu0 %v946
    %1285 = vmatpush.bf16.msra.mxu0 %v942
    %1286 = vmatpush.bf16.msra.mxu0 %v938
    %1287 = vmatpush.bf16.msra.mxu0 %v934
    %1288 = vmatmul.bf16.gmra.mxu0 %v88
    %v1289 = vpop.f32.mrf.mxu0
    %v1290 = vadd.f32 %v1277, %v1289
    %v1291 = vpop.f32.mrf.mxu0
    %1292 = vdwg.mxu0
    %1293 = vmatpush.bf16.msra.mxu0 %v994
    %1294 = vmatpush.bf16.msra.mxu0 %v990
    %1295 = vmatpush.bf16.msra.mxu0 %v986
    %1296 = vmatpush.bf16.msra.mxu0 %v982
    %1297 = vmatpush.bf16.msra.mxu0 %v978
    %1298 = vmatpush.bf16.msra.mxu0 %v974
    %1299 = vmatpush.bf16.msra.mxu0 %v970
    %1300 = vmatpush.bf16.msra.mxu0 %v966
    %1301 = vmatmul.bf16.gmra.mxu0 %v89
    %v1302 = vpop.f32.mrf.mxu0
    %v1303 = vadd.f32 %v1290, %v1302
    %v1304 = vpop.f32.mrf.mxu0
    %1305 = vdwg.mxu0
    %1306 = vmatpush.bf16.msra.mxu0 %v1026
    %1307 = vmatpush.bf16.msra.mxu0 %v1022
    %1308 = vmatpush.bf16.msra.mxu0 %v1018
    %1309 = vmatpush.bf16.msra.mxu0 %v1014
    %1310 = vmatpush.bf16.msra.mxu0 %v1010
    %1311 = vmatpush.bf16.msra.mxu0 %v1006
    %1312 = vmatpush.bf16.msra.mxu0 %v1002
    %1313 = vmatpush.bf16.msra.mxu0 %v998
    %1314 = vmatmul.bf16.gmra.mxu0 %v90
    %v1315 = vpop.f32.mrf.mxu0
    %v1316 = vadd.f32 %v1303, %v1315
    %v1317 = vpop.f32.mrf.mxu0
    %1318 = vdwg.mxu0
    %1319 = vmatpush.bf16.msra.mxu0 %v1058
    %1320 = vmatpush.bf16.msra.mxu0 %v1054
    %1321 = vmatpush.bf16.msra.mxu0 %v1050
    %1322 = vmatpush.bf16.msra.mxu0 %v1046
    %1323 = vmatpush.bf16.msra.mxu0 %v1042
    %1324 = vmatpush.bf16.msra.mxu0 %v1038
    %1325 = vmatpush.bf16.msra.mxu0 %v1034
    %1326 = vmatpush.bf16.msra.mxu0 %v1030
    %1327 = vmatmul.bf16.gmra.mxu0 %v91
    %v1328 = vpop.f32.mrf.mxu0
    %v1329 = vadd.f32 %v1316, %v1328
    %v1330 = vpop.f32.mrf.mxu0
    %1331 = vdwg.mxu0
    %1332 = vmatpush.bf16.msra.mxu0 %v899
    %1333 = vmatpush.bf16.msra.mxu0 %v895
    %1334 = vmatpush.bf16.msra.mxu0 %v891
    %1335 = vmatpush.bf16.msra.mxu0 %v887
    %1336 = vmatpush.bf16.msra.mxu0 %v883
    %1337 = vmatpush.bf16.msra.mxu0 %v879
    %1338 = vmatpush.bf16.msra.mxu0 %v875
    %1339 = vmatpush.bf16.msra.mxu0 %v871
    %1340 = vmatmul.bf16.gmra.mxu0 %v86
    %v1341 = vpop.f32.mrf.mxu0
    %v1342 = vadd.f32 %v287, %v1341
    %v1343 = vpop.f32.mrf.mxu0
    %1344 = vdwg.mxu0
    %1345 = vmatpush.bf16.msra.mxu0 %v931
    %1346 = vmatpush.bf16.msra.mxu0 %v927
    %1347 = vmatpush.bf16.msra.mxu0 %v923
    %1348 = vmatpush.bf16.msra.mxu0 %v919
    %1349 = vmatpush.bf16.msra.mxu0 %v915
    %1350 = vmatpush.bf16.msra.mxu0 %v911
    %1351 = vmatpush.bf16.msra.mxu0 %v907
    %1352 = vmatpush.bf16.msra.mxu0 %v903
    %1353 = vmatmul.bf16.gmra.mxu0 %v87
    %v1354 = vpop.f32.mrf.mxu0
    %v1355 = vadd.f32 %v1342, %v1354
    %v1356 = vpop.f32.mrf.mxu0
    %1357 = vdwg.mxu0
    %1358 = vmatpush.bf16.msra.mxu0 %v963
    %1359 = vmatpush.bf16.msra.mxu0 %v959
    %1360 = vmatpush.bf16.msra.mxu0 %v955
    %1361 = vmatpush.bf16.msra.mxu0 %v951
    %1362 = vmatpush.bf16.msra.mxu0 %v947
    %1363 = vmatpush.bf16.msra.mxu0 %v943
    %1364 = vmatpush.bf16.msra.mxu0 %v939
    %1365 = vmatpush.bf16.msra.mxu0 %v935
    %1366 = vmatmul.bf16.gmra.mxu0 %v88
    %v1367 = vpop.f32.mrf.mxu0
    %v1368 = vadd.f32 %v1355, %v1367
    %v1369 = vpop.f32.mrf.mxu0
    %1370 = vdwg.mxu0
    %1371 = vmatpush.bf16.msra.mxu0 %v995
    %1372 = vmatpush.bf16.msra.mxu0 %v991
    %1373 = vmatpush.bf16.msra.mxu0 %v987
    %1374 = vmatpush.bf16.msra.mxu0 %v983
    %1375 = vmatpush.bf16.msra.mxu0 %v979
    %1376 = vmatpush.bf16.msra.mxu0 %v975
    %1377 = vmatpush.bf16.msra.mxu0 %v971
    %1378 = vmatpush.bf16.msra.mxu0 %v967
    %1379 = vmatmul.bf16.gmra.mxu0 %v89
    %v1380 = vpop.f32.mrf.mxu0
    %v1381 = vadd.f32 %v1368, %v1380
    %v1382 = vpop.f32.mrf.mxu0
    %1383 = vdwg.mxu0
    %1384 = vmatpush.bf16.msra.mxu0 %v1027
    %1385 = vmatpush.bf16.msra.mxu0 %v1023
    %1386 = vmatpush.bf16.msra.mxu0 %v1019
    %1387 = vmatpush.bf16.msra.mxu0 %v1015
    %1388 = vmatpush.bf16.msra.mxu0 %v1011
    %1389 = vmatpush.bf16.msra.mxu0 %v1007
    %1390 = vmatpush.bf16.msra.mxu0 %v1003
    %1391 = vmatpush.bf16.msra.mxu0 %v999
    %1392 = vmatmul.bf16.gmra.mxu0 %v90
    %v1393 = vpop.f32.mrf.mxu0
    %v1394 = vadd.f32 %v1381, %v1393
    %v1395 = vpop.f32.mrf.mxu0
    %1396 = vdwg.mxu0
    %1397 = vmatpush.bf16.msra.mxu0 %v1059
    %1398 = vmatpush.bf16.msra.mxu0 %v1055
    %1399 = vmatpush.bf16.msra.mxu0 %v1051
    %1400 = vmatpush.bf16.msra.mxu0 %v1047
    %1401 = vmatpush.bf16.msra.mxu0 %v1043
    %1402 = vmatpush.bf16.msra.mxu0 %v1039
    %1403 = vmatpush.bf16.msra.mxu0 %v1035
    %1404 = vmatpush.bf16.msra.mxu0 %v1031
    %1405 = vmatmul.bf16.gmra.mxu0 %v91
    %v1406 = vpop.f32.mrf.mxu0
    %v1407 = vadd.f32 %v1394, %v1406
    %v1408 = vpop.f32.mrf.mxu0
    %1409 = vdwg.mxu0
    %1410 = vmatpush.bf16.msra.mxu0 %v900
    %1411 = vmatpush.bf16.msra.mxu0 %v896
    %1412 = vmatpush.bf16.msra.mxu0 %v892
    %1413 = vmatpush.bf16.msra.mxu0 %v888
    %1414 = vmatpush.bf16.msra.mxu0 %v884
    %1415 = vmatpush.bf16.msra.mxu0 %v880
    %1416 = vmatpush.bf16.msra.mxu0 %v876
    %1417 = vmatpush.bf16.msra.mxu0 %v872
    %1418 = vmatmul.bf16.gmra.mxu0 %v86
    %v1419 = vpop.f32.mrf.mxu0
    %v1420 = vadd.f32 %v288, %v1419
    %v1421 = vpop.f32.mrf.mxu0
    %1422 = vdwg.mxu0
    %1423 = vmatpush.bf16.msra.mxu0 %v932
    %1424 = vmatpush.bf16.msra.mxu0 %v928
    %1425 = vmatpush.bf16.msra.mxu0 %v924
    %1426 = vmatpush.bf16.msra.mxu0 %v920
    %1427 = vmatpush.bf16.msra.mxu0 %v916
    %1428 = vmatpush.bf16.msra.mxu0 %v912
    %1429 = vmatpush.bf16.msra.mxu0 %v908
    %1430 = vmatpush.bf16.msra.mxu0 %v904
    %1431 = vmatmul.bf16.gmra.mxu0 %v87
    %v1432 = vpop.f32.mrf.mxu0
    %v1433 = vadd.f32 %v1420, %v1432
    %v1434 = vpop.f32.mrf.mxu0
    %1435 = vdwg.mxu0
    %1436 = vmatpush.bf16.msra.mxu0 %v964
    %1437 = vmatpush.bf16.msra.mxu0 %v960
    %1438 = vmatpush.bf16.msra.mxu0 %v956
    %1439 = vmatpush.bf16.msra.mxu0 %v952
    %1440 = vmatpush.bf16.msra.mxu0 %v948
    %1441 = vmatpush.bf16.msra.mxu0 %v944
    %1442 = vmatpush.bf16.msra.mxu0 %v940
    %1443 = vmatpush.bf16.msra.mxu0 %v936
    %1444 = vmatmul.bf16.gmra.mxu0 %v88
    %v1445 = vpop.f32.mrf.mxu0
    %v1446 = vadd.f32 %v1433, %v1445
    %v1447 = vpop.f32.mrf.mxu0
    %1448 = vdwg.mxu0
    %1449 = vmatpush.bf16.msra.mxu0 %v996
    %1450 = vmatpush.bf16.msra.mxu0 %v992
    %1451 = vmatpush.bf16.msra.mxu0 %v988
    %1452 = vmatpush.bf16.msra.mxu0 %v984
    %1453 = vmatpush.bf16.msra.mxu0 %v980
    %1454 = vmatpush.bf16.msra.mxu0 %v976
    %1455 = vmatpush.bf16.msra.mxu0 %v972
    %1456 = vmatpush.bf16.msra.mxu0 %v968
    %1457 = vmatmul.bf16.gmra.mxu0 %v89
    %v1458 = vpop.f32.mrf.mxu0
    %v1459 = vadd.f32 %v1446, %v1458
    %v1460 = vpop.f32.mrf.mxu0
    %1461 = vdwg.mxu0
    %1462 = vmatpush.bf16.msra.mxu0 %v1028
    %1463 = vmatpush.bf16.msra.mxu0 %v1024
    %1464 = vmatpush.bf16.msra.mxu0 %v1020
    %1465 = vmatpush.bf16.msra.mxu0 %v1016
    %1466 = vmatpush.bf16.msra.mxu0 %v1012
    %1467 = vmatpush.bf16.msra.mxu0 %v1008
    %1468 = vmatpush.bf16.msra.mxu0 %v1004
    %1469 = vmatpush.bf16.msra.mxu0 %v1000
    %1470 = vmatmul.bf16.gmra.mxu0 %v90
    %v1471 = vpop.f32.mrf.mxu0
    %v1472 = vadd.f32 %v1459, %v1471
    %v1473 = vpop.f32.mrf.mxu0
    %1474 = vdwg.mxu0
    %1475 = vmatpush.bf16.msra.mxu0 %v1060
    %1476 = vmatpush.bf16.msra.mxu0 %v1056
    %1477 = vmatpush.bf16.msra.mxu0 %v1052
    %1478 = vmatpush.bf16.msra.mxu0 %v1048
    %1479 = vmatpush.bf16.msra.mxu0 %v1044
    %1480 = vmatpush.bf16.msra.mxu0 %v1040
    %1481 = vmatpush.bf16.msra.mxu0 %v1036
    %1482 = vmatpush.bf16.msra.mxu0 %v1032
    %1483 = vmatmul.bf16.gmra.mxu0 %v91
    %v1484 = vpop.f32.mrf.mxu0
    %v1485 = vadd.f32 %v1472, %v1484
    %v1486 = vpop.f32.mrf.mxu0
    %1487 = vdwg.mxu0
    %1488 = vmatpush.bf16.msra.mxu0 %v901
    %1489 = vmatpush.bf16.msra.mxu0 %v897
    %1490 = vmatpush.bf16.msra.mxu0 %v893
    %1491 = vmatpush.bf16.msra.mxu0 %v889
    %1492 = vmatpush.bf16.msra.mxu0 %v885
    %1493 = vmatpush.bf16.msra.mxu0 %v881
    %1494 = vmatpush.bf16.msra.mxu0 %v877
    %1495 = vmatpush.bf16.msra.mxu0 %v873
    %1496 = vmatmul.bf16.gmra.mxu0 %v86
    %v1497 = vpop.f32.mrf.mxu0
    %v1498 = vadd.f32 %v289, %v1497
    %v1499 = vpop.f32.mrf.mxu0
    %1500 = vdwg.mxu0
    %1501 = vmatpush.bf16.msra.mxu0 %v933
    %1502 = vmatpush.bf16.msra.mxu0 %v929
    %1503 = vmatpush.bf16.msra.mxu0 %v925
    %1504 = vmatpush.bf16.msra.mxu0 %v921
    %1505 = vmatpush.bf16.msra.mxu0 %v917
    %1506 = vmatpush.bf16.msra.mxu0 %v913
    %1507 = vmatpush.bf16.msra.mxu0 %v909
    %1508 = vmatpush.bf16.msra.mxu0 %v905
    %1509 = vmatmul.bf16.gmra.mxu0 %v87
    %v1510 = vpop.f32.mrf.mxu0
    %v1511 = vadd.f32 %v1498, %v1510
    %v1512 = vpop.f32.mrf.mxu0
    %1513 = vdwg.mxu0
    %1514 = vmatpush.bf16.msra.mxu0 %v965
    %1515 = vmatpush.bf16.msra.mxu0 %v961
    %1516 = vmatpush.bf16.msra.mxu0 %v957
    %1517 = vmatpush.bf16.msra.mxu0 %v953
    %1518 = vmatpush.bf16.msra.mxu0 %v949
    %1519 = vmatpush.bf16.msra.mxu0 %v945
    %1520 = vmatpush.bf16.msra.mxu0 %v941
    %1521 = vmatpush.bf16.msra.mxu0 %v937
    %1522 = vmatmul.bf16.gmra.mxu0 %v88
    %v1523 = vpop.f32.mrf.mxu0
    %v1524 = vadd.f32 %v1511, %v1523
    %v1525 = vpop.f32.mrf.mxu0
    %1526 = vdwg.mxu0
    %1527 = vmatpush.bf16.msra.mxu0 %v997
    %1528 = vmatpush.bf16.msra.mxu0 %v993
    %1529 = vmatpush.bf16.msra.mxu0 %v989
    %1530 = vmatpush.bf16.msra.mxu0 %v985
    %1531 = vmatpush.bf16.msra.mxu0 %v981
    %1532 = vmatpush.bf16.msra.mxu0 %v977
    %1533 = vmatpush.bf16.msra.mxu0 %v973
    %1534 = vmatpush.bf16.msra.mxu0 %v969
    %1535 = vmatmul.bf16.gmra.mxu0 %v89
    %v1536 = vpop.f32.mrf.mxu0
    %v1537 = vadd.f32 %v1524, %v1536
    %v1538 = vpop.f32.mrf.mxu0
    %1539 = vdwg.mxu0
    %1540 = vmatpush.bf16.msra.mxu0 %v1029
    %1541 = vmatpush.bf16.msra.mxu0 %v1025
    %1542 = vmatpush.bf16.msra.mxu0 %v1021
    %1543 = vmatpush.bf16.msra.mxu0 %v1017
    %1544 = vmatpush.bf16.msra.mxu0 %v1013
    %1545 = vmatpush.bf16.msra.mxu0 %v1009
    %1546 = vmatpush.bf16.msra.mxu0 %v1005
    %1547 = vmatpush.bf16.msra.mxu0 %v1001
    %1548 = vmatmul.bf16.gmra.mxu0 %v90
    %v1549 = vpop.f32.mrf.mxu0
    %v1550 = vadd.f32 %v1537, %v1549
    %v1551 = vpop.f32.mrf.mxu0
    %1552 = vdwg.mxu0
    %1553 = vmatpush.bf16.msra.mxu0 %v1061
    %1554 = vmatpush.bf16.msra.mxu0 %v1057
    %1555 = vmatpush.bf16.msra.mxu0 %v1053
    %1556 = vmatpush.bf16.msra.mxu0 %v1049
    %1557 = vmatpush.bf16.msra.mxu0 %v1045
    %1558 = vmatpush.bf16.msra.mxu0 %v1041
    %1559 = vmatpush.bf16.msra.mxu0 %v1037
    %1560 = vmatpush.bf16.msra.mxu0 %v1033
    %1561 = vmatmul.bf16.gmra.mxu0 %v91
    %v1562 = vpop.f32.mrf.mxu0
    %v1563 = vadd.f32 %v1550, %v1562
    %v1564 = vpop.f32.mrf.mxu0
    %1565 = vdwg.mxu0
    %v1566 = vmax.f32 %v1329, 0.0
    %v1567 = vmax.f32 %v1407, 0.0
    %v1568 = vmax.f32 %v1485, 0.0
    %v1569 = vmax.f32 %v1563, 0.0
    %v1570 = vpack.c.bf16 %v1566, %v1566
    %v1571 = vpack.c.bf16 %v1567, %v1567
    %v1572 = vpack.c.bf16 %v1568, %v1568
    %v1573 = vpack.c.bf16 %v1569, %v1569
    %v1574 = vld [vmem:[#allocation8] sm:$0xff]
    %v1575 = vld [vmem:[#allocation8 + $0x8] sm:$0xff]
    %v1576 = vld [vmem:[#allocation8 + $0x10] sm:$0xff]
    %v1577 = vld [vmem:[#allocation8 + $0x18] sm:$0xff]
    %v1578 = vld [vmem:[#allocation8 + $0x20] sm:$0xff]
    %v1579 = vld [vmem:[#allocation8 + $0x28] sm:$0xff]
    %v1580 = vld [vmem:[#allocation8 + $0x30] sm:$0xff]
    %v1581 = vld [vmem:[#allocation8 + $0x38] sm:$0xff]
    %v1582 = vld [vmem:[#allocation8 + $0x40] sm:$0xff]
    %v1583 = vld [vmem:[#allocation8 + $0x48] sm:$0xff]
    %v1584 = vld [vmem:[#allocation8 + $0x50] sm:$0xff]
    %v1585 = vld [vmem:[#allocation8 + $0x58] sm:$0xff]
    %v1586 = vld [vmem:[#allocation8 + $0x60] sm:$0xff]
    %v1587 = vld [vmem:[#allocation8 + $0x68] sm:$0xff]
    %v1588 = vld [vmem:[#allocation8 + $0x70] sm:$0xff]
    %v1589 = vld [vmem:[#allocation8 + $0x78] sm:$0xff]
    %v1590 = vld [vmem:[#allocation8 + $0x80] sm:$0xff]
    %v1591 = vld [vmem:[#allocation8 + $0x88] sm:$0xff]
    %v1592 = vld [vmem:[#allocation8 + $0x90] sm:$0xff]
    %v1593 = vld [vmem:[#allocation8 + $0x98] sm:$0xff]
    %v1594 = vld [vmem:[#allocation8 + $0xa0] sm:$0xff]
    %v1595 = vld [vmem:[#allocation8 + $0xa8] sm:$0xff]
    %v1596 = vld [vmem:[#allocation8 + $0xb0] sm:$0xff]
    %v1597 = vld [vmem:[#allocation8 + $0xb8] sm:$0xff]
    %v1598 = vld [vmem:[#allocation8 + $0xc0] sm:$0xff]
    %v1599 = vld [vmem:[#allocation8 + $0xc8] sm:$0xff]
    %v1600 = vld [vmem:[#allocation8 + $0xd0] sm:$0xff]
    %v1601 = vld [vmem:[#allocation8 + $0xd8] sm:$0xff]
    %v1602 = vld [vmem:[#allocation8 + $0xe0] sm:$0xff]
    %v1603 = vld [vmem:[#allocation8 + $0xe8] sm:$0xff]
    %v1604 = vld [vmem:[#allocation8 + $0xf0] sm:$0xff]
    %v1605 = vld [vmem:[#allocation8 + $0xf8] sm:$0xff]
    %v1606 = vld [vmem:[#allocation8 + $0x100] sm:$0xff]
    %v1607 = vld [vmem:[#allocation8 + $0x108] sm:$0xff]
    %v1608 = vld [vmem:[#allocation8 + $0x110] sm:$0xff]
    %v1609 = vld [vmem:[#allocation8 + $0x118] sm:$0xff]
    %v1610 = vld [vmem:[#allocation8 + $0x120] sm:$0xff]
    %v1611 = vld [vmem:[#allocation8 + $0x128] sm:$0xff]
    %v1612 = vld [vmem:[#allocation8 + $0x130] sm:$0xff]
    %v1613 = vld [vmem:[#allocation8 + $0x138] sm:$0xff]
    %v1614 = vld [vmem:[#allocation8 + $0x140] sm:$0xff]
    %v1615 = vld [vmem:[#allocation8 + $0x148] sm:$0xff]
    %v1616 = vld [vmem:[#allocation8 + $0x150] sm:$0xff]
    %v1617 = vld [vmem:[#allocation8 + $0x158] sm:$0xff]
    %v1618 = vld [vmem:[#allocation8 + $0x160] sm:$0xff]
    %v1619 = vld [vmem:[#allocation8 + $0x168] sm:$0xff]
    %v1620 = vld [vmem:[#allocation8 + $0x170] sm:$0xff]
    %v1621 = vld [vmem:[#allocation8 + $0x178] sm:$0xff]
    %v1622 = vld [vmem:[#allocation8 + $0x180] sm:$0xff]
    %v1623 = vld [vmem:[#allocation8 + $0x188] sm:$0xff]
    %v1624 = vld [vmem:[#allocation8 + $0x190] sm:$0xff]
    %v1625 = vld [vmem:[#allocation8 + $0x198] sm:$0xff]
    %v1626 = vld [vmem:[#allocation8 + $0x1a0] sm:$0xff]
    %v1627 = vld [vmem:[#allocation8 + $0x1a8] sm:$0xff]
    %v1628 = vld [vmem:[#allocation8 + $0x1b0] sm:$0xff]
    %v1629 = vld [vmem:[#allocation8 + $0x1b8] sm:$0xff]
    %v1630 = vld [vmem:[#allocation8 + $0x1c0] sm:$0xff]
    %v1631 = vld [vmem:[#allocation8 + $0x1c8] sm:$0xff]
    %v1632 = vld [vmem:[#allocation8 + $0x1d0] sm:$0xff]
    %v1633 = vld [vmem:[#allocation8 + $0x1d8] sm:$0xff]
    %v1634 = vld [vmem:[#allocation8 + $0x1e0] sm:$0xff]
    %v1635 = vld [vmem:[#allocation8 + $0x1e8] sm:$0xff]
    %v1636 = vld [vmem:[#allocation8 + $0x1f0] sm:$0xff]
    %v1637 = vld [vmem:[#allocation8 + $0x1f8] sm:$0xff]
    %v1638 = vld [vmem:[%s4] sm:$0x3]
    %v1640 = vperm.slane %v1638, 0
    %v1641 = vperm.slane %v1638, 1
    %v1708 = vunpack.c.l.b16 %v1574
    %v1709 = vunpack.c.h.b16 %v1574
    %v1710 = vunpack.c.l.b16 %v1575
    %v1711 = vunpack.c.h.b16 %v1575
    %v1712 = vunpack.c.l.b16 %v1576
    %v1713 = vunpack.c.h.b16 %v1576
    %v1714 = vunpack.c.l.b16 %v1577
    %v1715 = vunpack.c.h.b16 %v1577
    %v1716 = vunpack.c.l.b16 %v1578
    %v1717 = vunpack.c.h.b16 %v1578
    %v1718 = vunpack.c.l.b16 %v1579
    %v1719 = vunpack.c.h.b16 %v1579
    %v1720 = vunpack.c.l.b16 %v1580
    %v1721 = vunpack.c.h.b16 %v1580
    %v1722 = vunpack.c.l.b16 %v1581
    %v1723 = vunpack.c.h.b16 %v1581
    %v1724 = vunpack.c.l.b16 %v1582
    %v1725 = vunpack.c.h.b16 %v1582
    %v1726 = vunpack.c.l.b16 %v1583
    %v1727 = vunpack.c.h.b16 %v1583
    %v1728 = vunpack.c.l.b16 %v1584
    %v1729 = vunpack.c.h.b16 %v1584
    %v1730 = vunpack.c.l.b16 %v1585
    %v1731 = vunpack.c.h.b16 %v1585
    %v1732 = vunpack.c.l.b16 %v1586
    %v1733 = vunpack.c.h.b16 %v1586
    %v1734 = vunpack.c.l.b16 %v1587
    %v1735 = vunpack.c.h.b16 %v1587
    %v1736 = vunpack.c.l.b16 %v1588
    %v1737 = vunpack.c.h.b16 %v1588
    %v1738 = vunpack.c.l.b16 %v1589
    %v1739 = vunpack.c.h.b16 %v1589
    %v1740 = vunpack.c.l.b16 %v1590
    %v1741 = vunpack.c.h.b16 %v1590
    %v1742 = vunpack.c.l.b16 %v1591
    %v1743 = vunpack.c.h.b16 %v1591
    %v1744 = vunpack.c.l.b16 %v1592
    %v1745 = vunpack.c.h.b16 %v1592
    %v1746 = vunpack.c.l.b16 %v1593
    %v1747 = vunpack.c.h.b16 %v1593
    %v1748 = vunpack.c.l.b16 %v1594
    %v1749 = vunpack.c.h.b16 %v1594
    %v1750 = vunpack.c.l.b16 %v1595
    %v1751 = vunpack.c.h.b16 %v1595
    %v1752 = vunpack.c.l.b16 %v1596
    %v1753 = vunpack.c.h.b16 %v1596
    %v1754 = vunpack.c.l.b16 %v1597
    %v1755 = vunpack.c.h.b16 %v1597
    %v1756 = vunpack.c.l.b16 %v1598
    %v1757 = vunpack.c.h.b16 %v1598
    %v1758 = vunpack.c.l.b16 %v1599
    %v1759 = vunpack.c.h.b16 %v1599
    %v1760 = vunpack.c.l.b16 %v1600
    %v1761 = vunpack.c.h.b16 %v1600
    %v1762 = vunpack.c.l.b16 %v1601
    %v1763 = vunpack.c.h.b16 %v1601
    %v1764 = vunpack.c.l.b16 %v1602
    %v1765 = vunpack.c.h.b16 %v1602
    %v1766 = vunpack.c.l.b16 %v1603
    %v1767 = vunpack.c.h.b16 %v1603
    %v1768 = vunpack.c.l.b16 %v1604
    %v1769 = vunpack.c.h.b16 %v1604
    %v1770 = vunpack.c.l.b16 %v1605
    %v1771 = vunpack.c.h.b16 %v1605
    %v1772 = vunpack.c.l.b16 %v1606
    %v1773 = vunpack.c.h.b16 %v1606
    %v1774 = vunpack.c.l.b16 %v1607
    %v1775 = vunpack.c.h.b16 %v1607
    %v1776 = vunpack.c.l.b16 %v1608
    %v1777 = vunpack.c.h.b16 %v1608
    %v1778 = vunpack.c.l.b16 %v1609
    %v1779 = vunpack.c.h.b16 %v1609
    %v1780 = vunpack.c.l.b16 %v1610
    %v1781 = vunpack.c.h.b16 %v1610
    %v1782 = vunpack.c.l.b16 %v1611
    %v1783 = vunpack.c.h.b16 %v1611
    %v1784 = vunpack.c.l.b16 %v1612
    %v1785 = vunpack.c.h.b16 %v1612
    %v1786 = vunpack.c.l.b16 %v1613
    %v1787 = vunpack.c.h.b16 %v1613
    %v1788 = vunpack.c.l.b16 %v1614
    %v1789 = vunpack.c.h.b16 %v1614
    %v1790 = vunpack.c.l.b16 %v1615
    %v1791 = vunpack.c.h.b16 %v1615
    %v1792 = vunpack.c.l.b16 %v1616
    %v1793 = vunpack.c.h.b16 %v1616
    %v1794 = vunpack.c.l.b16 %v1617
    %v1795 = vunpack.c.h.b16 %v1617
    %v1796 = vunpack.c.l.b16 %v1618
    %v1797 = vunpack.c.h.b16 %v1618
    %v1798 = vunpack.c.l.b16 %v1619
    %v1799 = vunpack.c.h.b16 %v1619
    %v1800 = vunpack.c.l.b16 %v1620
    %v1801 = vunpack.c.h.b16 %v1620
    %v1802 = vunpack.c.l.b16 %v1621
    %v1803 = vunpack.c.h.b16 %v1621
    %v1804 = vunpack.c.l.b16 %v1622
    %v1805 = vunpack.c.h.b16 %v1622
    %v1806 = vunpack.c.l.b16 %v1623
    %v1807 = vunpack.c.h.b16 %v1623
    %v1808 = vunpack.c.l.b16 %v1624
    %v1809 = vunpack.c.h.b16 %v1624
    %v1810 = vunpack.c.l.b16 %v1625
    %v1811 = vunpack.c.h.b16 %v1625
    %v1812 = vunpack.c.l.b16 %v1626
    %v1813 = vunpack.c.h.b16 %v1626
    %v1814 = vunpack.c.l.b16 %v1627
    %v1815 = vunpack.c.h.b16 %v1627
    %v1816 = vunpack.c.l.b16 %v1628
    %v1817 = vunpack.c.h.b16 %v1628
    %v1818 = vunpack.c.l.b16 %v1629
    %v1819 = vunpack.c.h.b16 %v1629
    %v1820 = vunpack.c.l.b16 %v1630
    %v1821 = vunpack.c.h.b16 %v1630
    %v1822 = vunpack.c.l.b16 %v1631
    %v1823 = vunpack.c.h.b16 %v1631
    %v1824 = vunpack.c.l.b16 %v1632
    %v1825 = vunpack.c.h.b16 %v1632
    %v1826 = vunpack.c.l.b16 %v1633
    %v1827 = vunpack.c.h.b16 %v1633
    %v1828 = vunpack.c.l.b16 %v1634
    %v1829 = vunpack.c.h.b16 %v1634
    %v1830 = vunpack.c.l.b16 %v1635
    %v1831 = vunpack.c.h.b16 %v1635
    %v1832 = vunpack.c.l.b16 %v1636
    %v1833 = vunpack.c.h.b16 %v1636
    %v1834 = vunpack.c.l.b16 %v1637
    %v1835 = vunpack.c.h.b16 %v1637
    %v1836 = vpack.c.b16 %v1710, %v1708
    %v1837 = vpack.c.b16 %v1711, %v1709
    %v1838 = vpack.c.b16 %v1714, %v1712
    %v1839 = vpack.c.b16 %v1715, %v1713
    %v1840 = vpack.c.b16 %v1718, %v1716
    %v1841 = vpack.c.b16 %v1719, %v1717
    %v1842 = vpack.c.b16 %v1722, %v1720
    %v1843 = vpack.c.b16 %v1723, %v1721
    %v1844 = vpack.c.b16 %v1726, %v1724
    %v1845 = vpack.c.b16 %v1727, %v1725
    %v1846 = vpack.c.b16 %v1730, %v1728
    %v1847 = vpack.c.b16 %v1731, %v1729
    %v1848 = vpack.c.b16 %v1734, %v1732
    %v1849 = vpack.c.b16 %v1735, %v1733
    %v1850 = vpack.c.b16 %v1738, %v1736
    %v1851 = vpack.c.b16 %v1739, %v1737
    %v1852 = vpack.c.b16 %v1742, %v1740
    %v1853 = vpack.c.b16 %v1743, %v1741
    %v1854 = vpack.c.b16 %v1746, %v1744
    %v1855 = vpack.c.b16 %v1747, %v1745
    %v1856 = vpack.c.b16 %v1750, %v1748
    %v1857 = vpack.c.b16 %v1751, %v1749
    %v1858 = vpack.c.b16 %v1754, %v1752
    %v1859 = vpack.c.b16 %v1755, %v1753
    %v1860 = vpack.c.b16 %v1758, %v1756
    %v1861 = vpack.c.b16 %v1759, %v1757
    %v1862 = vpack.c.b16 %v1762, %v1760
    %v1863 = vpack.c.b16 %v1763, %v1761
    %v1864 = vpack.c.b16 %v1766, %v1764
    %v1865 = vpack.c.b16 %v1767, %v1765
    %v1866 = vpack.c.b16 %v1770, %v1768
    %v1867 = vpack.c.b16 %v1771, %v1769
    %v1868 = vpack.c.b16 %v1774, %v1772
    %v1869 = vpack.c.b16 %v1775, %v1773
    %v1870 = vpack.c.b16 %v1778, %v1776
    %v1871 = vpack.c.b16 %v1779, %v1777
    %v1872 = vpack.c.b16 %v1782, %v1780
    %v1873 = vpack.c.b16 %v1783, %v1781
    %v1874 = vpack.c.b16 %v1786, %v1784
    %v1875 = vpack.c.b16 %v1787, %v1785
    %v1876 = vpack.c.b16 %v1790, %v1788
    %v1877 = vpack.c.b16 %v1791, %v1789
    %v1878 = vpack.c.b16 %v1794, %v1792
    %v1879 = vpack.c.b16 %v1795, %v1793
    %v1880 = vpack.c.b16 %v1798, %v1796
    %v1881 = vpack.c.b16 %v1799, %v1797
    %v1882 = vpack.c.b16 %v1802, %v1800
    %v1883 = vpack.c.b16 %v1803, %v1801
    %v1884 = vpack.c.b16 %v1806, %v1804
    %v1885 = vpack.c.b16 %v1807, %v1805
    %v1886 = vpack.c.b16 %v1810, %v1808
    %v1887 = vpack.c.b16 %v1811, %v1809
    %v1888 = vpack.c.b16 %v1814, %v1812
    %v1889 = vpack.c.b16 %v1815, %v1813
    %v1890 = vpack.c.b16 %v1818, %v1816
    %v1891 = vpack.c.b16 %v1819, %v1817
    %v1892 = vpack.c.b16 %v1822, %v1820
    %v1893 = vpack.c.b16 %v1823, %v1821
    %v1894 = vpack.c.b16 %v1826, %v1824
    %v1895 = vpack.c.b16 %v1827, %v1825
    %v1896 = vpack.c.b16 %v1830, %v1828
    %v1897 = vpack.c.b16 %v1831, %v1829
    %v1898 = vpack.c.b16 %v1834, %v1832
    %v1899 = vpack.c.b16 %v1835, %v1833
    %1964 = vmatpush.bf16.msra.mxu0 %v1850
    %1965 = vmatpush.bf16.msra.mxu0 %v1848
    %1966 = vmatpush.bf16.msra.mxu0 %v1846
    %1967 = vmatpush.bf16.msra.mxu0 %v1844
    %1968 = vmatpush.bf16.msra.mxu0 %v1842
    %1969 = vmatpush.bf16.msra.mxu0 %v1840
    %1970 = vmatpush.bf16.msra.mxu0 %v1838
    %1971 = vmatpush.bf16.msra.mxu0 %v1836
    %1972 = vmatmul.bf16.gmra.mxu0 %v1570
    %v1973 = vpop.f32.mrf.mxu0
    %v1974 = vadd.f32 %v1640, %v1973
    %v1975 = vpop.f32.mrf.mxu0
    %1976 = vdwg.mxu0
    %1977 = vmatpush.bf16.msra.mxu0 %v1866
    %1978 = vmatpush.bf16.msra.mxu0 %v1864
    %1979 = vmatpush.bf16.msra.mxu0 %v1862
    %1980 = vmatpush.bf16.msra.mxu0 %v1860
    %1981 = vmatpush.bf16.msra.mxu0 %v1858
    %1982 = vmatpush.bf16.msra.mxu0 %v1856
    %1983 = vmatpush.bf16.msra.mxu0 %v1854
    %1984 = vmatpush.bf16.msra.mxu0 %v1852
    %1985 = vmatmul.bf16.gmra.mxu0 %v1571
    %v1986 = vpop.f32.mrf.mxu0
    %v1987 = vadd.f32 %v1974, %v1986
    %v1988 = vpop.f32.mrf.mxu0
    %1989 = vdwg.mxu0
    %1990 = vmatpush.bf16.msra.mxu0 %v1882
    %1991 = vmatpush.bf16.msra.mxu0 %v1880
    %1992 = vmatpush.bf16.msra.mxu0 %v1878
    %1993 = vmatpush.bf16.msra.mxu0 %v1876
    %1994 = vmatpush.bf16.msra.mxu0 %v1874
    %1995 = vmatpush.bf16.msra.mxu0 %v1872
    %1996 = vmatpush.bf16.msra.mxu0 %v1870
    %1997 = vmatpush.bf16.msra.mxu0 %v1868
    %1998 = vmatmul.bf16.gmra.mxu0 %v1572
    %v1999 = vpop.f32.mrf.mxu0
    %v2000 = vadd.f32 %v1987, %v1999
    %v2001 = vpop.f32.mrf.mxu0
    %2002 = vdwg.mxu0
    %2003 = vmatpush.bf16.msra.mxu0 %v1898
    %2004 = vmatpush.bf16.msra.mxu0 %v1896
    %2005 = vmatpush.bf16.msra.mxu0 %v1894
    %2006 = vmatpush.bf16.msra.mxu0 %v1892
    %2007 = vmatpush.bf16.msra.mxu0 %v1890
    %2008 = vmatpush.bf16.msra.mxu0 %v1888
    %2009 = vmatpush.bf16.msra.mxu0 %v1886
    %2010 = vmatpush.bf16.msra.mxu0 %v1884
    %2011 = vmatmul.bf16.gmra.mxu0 %v1573
    %v2012 = vpop.f32.mrf.mxu0
    %v2013 = vadd.f32 %v2000, %v2012
    %v2014 = vpop.f32.mrf.mxu0
    %2015 = vdwg.mxu0
    %2016 = vmatpush.bf16.msra.mxu0 %v1851
    %2017 = vmatpush.bf16.msra.mxu0 %v1849
    %2018 = vmatpush.bf16.msra.mxu0 %v1847
    %2019 = vmatpush.bf16.msra.mxu0 %v1845
    %2020 = vmatpush.bf16.msra.mxu0 %v1843
    %2021 = vmatpush.bf16.msra.mxu0 %v1841
    %2022 = vmatpush.bf16.msra.mxu0 %v1839
    %2023 = vmatpush.bf16.msra.mxu0 %v1837
    %2024 = vmatmul.bf16.gmra.mxu0 %v1570
    %v2025 = vpop.f32.mrf.mxu0
    %v2026 = vadd.f32 %v1641, %v2025
    %v2027 = vpop.f32.mrf.mxu0
    %2028 = vdwg.mxu0
    %2029 = vmatpush.bf16.msra.mxu0 %v1867
    %2030 = vmatpush.bf16.msra.mxu0 %v1865
    %2031 = vmatpush.bf16.msra.mxu0 %v1863
    %2032 = vmatpush.bf16.msra.mxu0 %v1861
    %2033 = vmatpush.bf16.msra.mxu0 %v1859
    %2034 = vmatpush.bf16.msra.mxu0 %v1857
    %2035 = vmatpush.bf16.msra.mxu0 %v1855
    %2036 = vmatpush.bf16.msra.mxu0 %v1853
    %2037 = vmatmul.bf16.gmra.mxu0 %v1571
    %v2038 = vpop.f32.mrf.mxu0
    %v2039 = vadd.f32 %v2026, %v2038
    %v2040 = vpop.f32.mrf.mxu0
    %2041 = vdwg.mxu0
    %2042 = vmatpush.bf16.msra.mxu0 %v1883
    %2043 = vmatpush.bf16.msra.mxu0 %v1881
    %2044 = vmatpush.bf16.msra.mxu0 %v1879
    %2045 = vmatpush.bf16.msra.mxu0 %v1877
    %2046 = vmatpush.bf16.msra.mxu0 %v1875
    %2047 = vmatpush.bf16.msra.mxu0 %v1873
    %2048 = vmatpush.bf16.msra.mxu0 %v1871
    %2049 = vmatpush.bf16.msra.mxu0 %v1869
    %2050 = vmatmul.bf16.gmra.mxu0 %v1572
    %v2051 = vpop.f32.mrf.mxu0
    %v2052 = vadd.f32 %v2039, %v2051
    %v2053 = vpop.f32.mrf.mxu0
    %2054 = vdwg.mxu0
    %2055 = vmatpush.bf16.msra.mxu0 %v1899
    %2056 = vmatpush.bf16.msra.mxu0 %v1897
    %2057 = vmatpush.bf16.msra.mxu0 %v1895
    %2058 = vmatpush.bf16.msra.mxu0 %v1893
    %2059 = vmatpush.bf16.msra.mxu0 %v1891
    %2060 = vmatpush.bf16.msra.mxu0 %v1889
    %2061 = vmatpush.bf16.msra.mxu0 %v1887
    %2062 = vmatpush.bf16.msra.mxu0 %v1885
    %2063 = vmatmul.bf16.gmra.mxu0 %v1573
    %v2064 = vpop.f32.mrf.mxu0
    %v2065 = vadd.f32 %v2052, %v2064
    %v2066 = vpop.f32.mrf.mxu0
    %2067 = vdwg.mxu0
    %2068 = vst [vmem:[#allocation10] sm:$0xff] %v2013
    %2069 = vst [vmem:[#allocation10 + $0x8] sm:$0xff] %v2065
    // Predicated region
    $region38: #{tpu_custom_call.1} parent=1 // pred_check
      _
    $region39: #{tpu_custom_call.1} parent=1 // pred_check_branch
      %2071 = sbr.rel (0) target = $region41
    $region40: #{tpu_custom_call.1} parent=1 // pred_region
      %2073 = vsyncadd [#allocation4], 0
      %s2075 = sshll.u32 [#allocation10], 4
      %s2076 = int_to_ptr.vmem [resolvable:$true] %s2075
      %s2077 = sshll.u32 %s5, 4
      %s2078 = int_to_ptr.hbm [resolvable:$true] %s2077
      %2080 = dma.vmem_to_hbm [thread:$0]  %s2076, 256, %s2078, [#allocation4]
    $region41: #{tpu_custom_call.1} parent=1 // pred_fallthru
      _
    // Predicated region
    $region42: #{tpu_custom_call.1} parent=1 // pred_check
      _
    $region43: #{tpu_custom_call.1} parent=1 // pred_check_branch
      %2082 = sbr.rel (0) target = $region45
    $region44: #{tpu_custom_call.1} parent=1 // pred_region
      %2084 = dma.done [#allocation4], 256
    $region45: #{tpu_custom_call.1} parent=1 // pred_fallthru
      _
    %2085 = vsyncpa [#allocation3], 1
    %2086 = vsyncpa [#allocation6], 1
    %2087 = vsyncpa [#allocation9], 1
    %2088 = vsyncpa [#allocation4], 1

</llo_original>
